<compile_context>
chip_gen: v5e
topology: v5e:2x2
jax: 0.10.0
libtpu: 0.0.40
codegen_flags: <defaults>
</compile_context>

<pallas_src>
import functools

import numpy as np
import jax
import jax.numpy as jnp
from jax.experimental import pallas as pl
from jax.experimental.pallas import tpu as pltpu


# ----------------------------------------------------------------------------
# Model configuration + derived conv geometry
# ----------------------------------------------------------------------------
CONV_LAYERS = [[3, 16, 3, 1, 0], [16, 32, 3, 1, 0]]  # [Cin, Cout, k, stride, pad]
IMG_H = IMG_W = 16
POOL_K = POOL_S = 2
LINEAR_OUTPUT_SIZES = [32]
CNMP_INPUT_DIM = 1
CNMP_OUTPUT_DIM = 1
ENC_HIDDEN = [64, 64, 64]
DEC_HIDDEN = [64, 64]

C0, C1, KK = CONV_LAYERS[0][0], CONV_LAYERS[0][1], CONV_LAYERS[0][2]   # 3, 16, 3
C2, KK2 = CONV_LAYERS[1][1], CONV_LAYERS[1][2]                          # 32, 3
OH1, OW1 = IMG_H - KK + 1, IMG_W - KK + 1                               # 14, 14
PH1 = (OH1 - POOL_K) // POOL_S + 1                                      # 7
PW1 = (OW1 - POOL_K) // POOL_S + 1                                      # 7
OH2, OW2 = PH1 - KK2 + 1, PW1 - KK2 + 1                                 # 5, 5
FLAT_DIM = C2 * OH2 * OW2                                               # 800
PAD8 = 8                                                                # tiny-dim pad


# ----------------------------------------------------------------------------
# Deterministic parameter init (PyTorch-equivalent layouts / fan-in init)
# ----------------------------------------------------------------------------
def init_params(key):
    def dense(k, fan_in, fan_out):
        kw, kb = jax.random.split(k)
        bound = 1.0 / jnp.sqrt(jnp.float32(fan_in))
        w = jax.random.uniform(kw, (fan_in, fan_out), jnp.float32, -bound, bound)
        b = jax.random.uniform(kb, (fan_out,), jnp.float32, -bound, bound)
        return w, b

    keys = iter(jax.random.split(key, 32))
    params = {"conv_w": [], "conv_b": [], "enc_w": [], "enc_b": [],
              "dec_w": [], "dec_b": []}

    # conv stack (PyTorch layout: (Cout, Cin, kh, kw))
    for (cin, cout, k, s, p) in CONV_LAYERS:
        fan_in = cin * k * k
        kw, kb = jax.random.split(next(keys))
        bound = 1.0 / jnp.sqrt(jnp.float32(fan_in))
        params["conv_w"].append(
            jax.random.uniform(kw, (cout, cin, k, k), jnp.float32, -bound, bound))
        params["conv_b"].append(
            jax.random.uniform(kb, (cout,), jnp.float32, -bound, bound))

    # single head linear: Linear(flatten_dim(NCHW order), L), no ReLU
    params["head_w"], params["head_b"] = dense(next(keys), FLAT_DIM,
                                               LINEAR_OUTPUT_SIZES[-1])

    # encoder: Linear+ReLU per hidden, then Linear(hidden[-2], hidden[-1])
    enc_in = LINEAR_OUTPUT_SIZES[-1] + CNMP_INPUT_DIM + CNMP_OUTPUT_DIM
    dims = [enc_in] + ENC_HIDDEN
    for i in range(len(ENC_HIDDEN)):
        w, b = dense(next(keys), dims[i], dims[i + 1])
        params["enc_w"].append(w); params["enc_b"].append(b)
    w, b = dense(next(keys), ENC_HIDDEN[-2], ENC_HIDDEN[-1])
    params["enc_w"].append(w); params["enc_b"].append(b)

    # decoder: Linear, (ReLU, Linear)*, ReLU, Linear(hidden[-1], 2*out)
    dec_in = CNMP_INPUT_DIM + ENC_HIDDEN[-1]
    dims = [dec_in] + DEC_HIDDEN
    for i in range(len(DEC_HIDDEN)):
        w, b = dense(next(keys), dims[i], dims[i + 1])
        params["dec_w"].append(w); params["dec_b"].append(b)
    w, b = dense(next(keys), DEC_HIDDEN[-1], 2 * CNMP_OUTPUT_DIM)
    params["dec_w"].append(w); params["dec_b"].append(b)
    return params


# ----------------------------------------------------------------------------
# One-time weight layout preparation (host-side numpy; exact f32 copies)
# ----------------------------------------------------------------------------
def prepare_params(params):
    assert all(l[3] == 1 and l[4] == 0 for l in CONV_LAYERS)
    assert POOL_K == 2 and POOL_S == 2

    g = lambda a: np.asarray(jax.device_get(a), dtype=np.float32)
    W1, b1 = g(params["conv_w"][0]), g(params["conv_b"][0])   # (16,3,3,3),(16,)
    W2, b2 = g(params["conv_w"][1]), g(params["conv_b"][1])   # (32,16,3,3),(32,)
    head_w, head_b = g(params["head_w"]), g(params["head_b"])
    enc_w = [g(w) for w in params["enc_w"]]
    enc_b = [g(b) for b in params["enc_b"]]
    dec_w = [g(w) for w in params["dec_w"]]
    dec_b = [g(b) for b in params["dec_b"]]

    # conv1 block-Toeplitz matrices: T1[dh*2+j] maps one input image row laid
    # out as (w, c) -> pooled-phase conv1 columns (pw, cout) for kernel row dh
    # and pool column-phase j.
    t1 = np.zeros((KK * POOL_K, IMG_W * C0, PW1 * C1), np.float32)
    for dh in range(KK):
        for j in range(POOL_K):
            for pw in range(PW1):
                for dw in range(KK):
                    w_idx = POOL_S * pw + j + dw
                    t1[dh * POOL_K + j,
                       w_idx * C0:(w_idx + 1) * C0,
                       pw * C1:(pw + 1) * C1] = W1[:, :, dh, dw].T
    b1t = np.tile(b1, PW1).reshape(1, PW1 * C1)

    # conv2 block-Toeplitz matrices: T2[dh] maps one pooled row (pw, c) ->
    # conv2 columns (ow, cout) for kernel row dh.
    t2 = np.zeros((KK2, PW1 * C1, OW2 * C2), np.float32)
    for dh in range(KK2):
        for ow in range(OW2):
            for dw in range(KK2):
                pw = ow + dw
                t2[dh, pw * C1:(pw + 1) * C1,
                   ow * C2:(ow + 1) * C2] = W2[:, :, dh, dw].T
    b2t = np.tile(b2, OW2).reshape(1, OW2 * C2)

    # head weight permuted from PyTorch NCHW-flatten rows (o, oh, ow) to the
    # kernel's per-output-row blocks indexed (oh, (ow, o)).
    L = head_w.shape[1]
    whead = (head_w.reshape(C2, OH2, OW2, L)
             .transpose(1, 2, 0, 3).reshape(OH2, OW2 * C2, L))
    bhead = head_b.reshape(1, L)

    d_obs = CNMP_INPUT_DIM + CNMP_OUTPUT_DIM
    d_tar = CNMP_INPUT_DIM

    # encoder: split first-layer weight into obs / conv parts (removes concat)
    e0_obs = np.zeros((PAD8, ENC_HIDDEN[0]), np.float32)
    e0_obs[:d_obs] = enc_w[0][:d_obs]
    e0_conv = enc_w[0][d_obs:]
    e_b0 = enc_b[0].reshape(1, -1)
    enc_hw = np.stack(enc_w[1:])                                  # (3, 64, 64)
    enc_hb = np.stack([b.reshape(1, -1) for b in enc_b[1:]])      # (3, 1, 64)

    # decoder: split first-layer weight into rep / tar parts
    E = ENC_HIDDEN[-1]
    d0_rep = dec_w[0][:E]
    d0_tar = np.zeros((PAD8, DEC_HIDDEN[0]), np.float32)
    d0_tar[:d_tar] = dec_w[0][E:]
    d_b0 = dec_b[0].reshape(1, -1)
    dec_hw = np.stack(dec_w[1:-1])                                # (1, 64, 64)
    dec_hb = np.stack([b.reshape(1, -1) for b in dec_b[1:-1]])    # (1, 1, 64)
    d_wf = dec_w[-1]
    d_bf = dec_b[-1].reshape(1, -1)

    prep = (t1, b1t, t2, b2t, whead, bhead,
            e0_obs, e0_conv, e_b0, enc_hw, enc_hb,
            d0_rep, d0_tar, d_b0, dec_hw, dec_hb, d_wf, d_bf)
    return tuple(jnp.asarray(a) for a in prep)


# ----------------------------------------------------------------------------
# The single fused kernel
# ----------------------------------------------------------------------------
def _conv_cnmp_kernel(
        x_even_ref, x_odd_ref, obs_ref, tar_ref,
        rep_obs_ref, rep_tar_ref, mean_ref,
        t1_ref, b1_ref, t2_ref, b2_ref, whead_ref, bhead_ref,
        e0_obs_ref, e0_conv_ref, e_b0_ref, enc_hw_ref, enc_hb_ref,
        d0_rep_ref, d0_tar_ref, d_b0_ref, dec_hw_ref, dec_hb_ref,
        d_wf_ref, d_bf_ref,
        out_ref,
        h1_scr, a2_scr, pad_scr,
        *, batch):
    f32 = jnp.float32
    B = batch
    x_par = (x_even_ref, x_odd_ref)   # input rows split by parity, rows (hh, b)

    # ---- conv1 + bias + ReLU + 2x2 max-pool -------------------------------
    # pre-activation for each pool phase (i, j) = sum over kernel rows dh of a
    # block-Toeplitz GEMM; max over phases == max-pool (bias/ReLU commute).
    pooled = None
    for i in range(POOL_K):
        for j in range(POOL_K):
            acc = None
            for dh in range(KK):
                s = i + dh
                lhs = x_par[s % 2][(s // 2) * B:(s // 2) * B + PH1 * B, :]
                d = jnp.dot(lhs, t1_ref[dh * POOL_K + j],
                            preferred_element_type=f32)
                acc = d if acc is None else acc + d
            pooled = acc if pooled is None else jnp.maximum(pooled, acc)
    h1 = jnp.maximum(pooled + b1_ref[...], 0.0)       # (B*PH1, PW1*C1)
    h1_scr[...] = h1

    # ---- conv2 + bias + ReLU ----------------------------------------------
    acc = None
    for dh in range(KK2):
        lhs = h1_scr[dh * B:dh * B + OH2 * B, :]      # (B*OH2, PW1*C1)
        d = jnp.dot(lhs, t2_ref[dh], preferred_element_type=f32)
        acc = d if acc is None else acc + d
    a2 = jnp.maximum(acc + b2_ref[...], 0.0)          # (B*OH2, OW2*C2)
    a2_scr[...] = a2

    # ---- flatten + head linear (NCHW order folded into whead permutation) --
    acc = None
    for oh in range(OH2):
        lhs = a2_scr[oh * B:oh * B + B, :]            # (B, OW2*C2)
        d = jnp.dot(lhs, whead_ref[oh], preferred_element_type=f32)
        acc = d if acc is None else acc + d
    conv_result = acc + bhead_ref[...]                # (B, L)

    # ---- encoder (batch folded into M = B*n_obs) ---------------------------
    # first layer = Linear(concat([obs, conv_rep])) with the concat removed by
    # splitting the weight; the per-batch repeat is a tiny selection GEMM.
    cr_term = jnp.dot(conv_result, e0_conv_ref[...], preferred_element_type=f32)
    pad_scr[...] = jnp.zeros_like(pad_scr)
    pad_scr[0:B, :] = cr_term
    cr_rep = jnp.dot(rep_obs_ref[...], pad_scr[...], preferred_element_type=f32)

    h = jnp.dot(obs_ref[...], e0_obs_ref[...], preferred_element_type=f32)
    h = jnp.maximum(h + cr_rep + e_b0_ref[...], 0.0)
    n_enc_mid = enc_hw_ref.shape[0]
    for li in range(n_enc_mid):
        h = jnp.dot(h, enc_hw_ref[li], preferred_element_type=f32) + enc_hb_ref[li]
        if li < n_enc_mid - 1:                        # last encoder layer: no ReLU
            h = jnp.maximum(h, 0.0)

    # ---- mean over observations per batch (constant averaging GEMM) --------
    rep = jnp.dot(mean_ref[...], h, preferred_element_type=f32)   # (PAD8, E)

    # ---- decoder (batch folded into M = B*n_tar) ---------------------------
    rep_rep = jnp.dot(rep_tar_ref[...], rep, preferred_element_type=f32)
    g = jnp.dot(tar_ref[...], d0_tar_ref[...], preferred_element_type=f32)
    g = g + jnp.dot(rep_rep, d0_rep_ref[...], preferred_element_type=f32)
    g = jnp.maximum(g + d_b0_ref[...], 0.0)
    n_dec_mid = dec_hw_ref.shape[0]
    for li in range(n_dec_mid):
        g = jnp.maximum(
            jnp.dot(g, dec_hw_ref[li], preferred_element_type=f32) + dec_hb_ref[li],
            0.0)
    g = jnp.dot(g, d_wf_ref[...], preferred_element_type=f32) + d_bf_ref[...]
    out_ref[...] = g                                   # (B*n_tar, 2*out_dim)


def _full_spec(shape):
    nd = len(shape)
    return pl.BlockSpec(tuple(shape), lambda i, _n=nd: (0,) * _n)


# ----------------------------------------------------------------------------
# Forward pass (== ConvCNMP.forward).  Per call: one tiny XLA layout shuffle of
# the raw inputs + ONE pallas_call.
# ----------------------------------------------------------------------------
@jax.jit
def conv_cnmp_forward(prep, conv_obs, cnmp_obs, cnmp_tar):
    B, cin, H, W = conv_obs.shape
    n_obs, d_obs = cnmp_obs.shape[1], cnmp_obs.shape[2]
    n_tar, d_tar = cnmp_tar.shape[1], cnmp_tar.shape[2]
    assert (cin, H, W) == (C0, IMG_H, IMG_W)
    assert d_obs <= PAD8 and d_tar <= PAD8 and B <= PAD8

    # raw image -> two parity-split row matrices, rows (hh, b), cols (w, c)
    x_rows = jnp.transpose(conv_obs, (0, 2, 3, 1)).reshape(B, H, W * cin)
    x_hb = jnp.transpose(x_rows, (1, 0, 2))                    # (H, B, W*C0)
    x_even = x_hb[0::2].reshape((H // 2) * B, W * cin)
    x_odd = x_hb[1::2].reshape((H // 2) * B, W * cin)

    # obs / tar with batch folded into M, tiny feature dims zero-padded to 8
    obs = jnp.pad(cnmp_obs.reshape(B * n_obs, d_obs), ((0, 0), (0, PAD8 - d_obs)))
    tar = jnp.pad(cnmp_tar.reshape(B * n_tar, d_tar), ((0, 0), (0, PAD8 - d_tar)))

    # constant selection / averaging matrices (shape-only dependent)
    def batch_sel(n_rows, group):
        r = jax.lax.broadcasted_iota(jnp.int32, (n_rows, PAD8), 0) // group
        c = jax.lax.broadcasted_iota(jnp.int32, (n_rows, PAD8), 1)
        return (r == c).astype(jnp.float32)

    rep_obs = batch_sel(B * n_obs, n_obs)                      # (B*n_obs, 8)
    rep_tar = batch_sel(B * n_tar, n_tar)                      # (B*n_tar, 8)
    mean_mat = jnp.transpose(rep_obs) / jnp.float32(n_obs)     # (8, B*n_obs)

    inputs = (x_even, x_odd, obs, tar, rep_obs, rep_tar, mean_mat) + tuple(prep)

    out_dim = 2 * CNMP_OUTPUT_DIM
    out = pl.pallas_call(
        functools.partial(_conv_cnmp_kernel, batch=B),
        grid=(1,),
        in_specs=[_full_spec(a.shape) for a in inputs],
        out_specs=_full_spec((B * n_tar, out_dim)),
        out_shape=jax.ShapeDtypeStruct((B * n_tar, out_dim), jnp.float32),
        scratch_shapes=[
            pltpu.VMEM((PH1 * B, PW1 * C1), jnp.float32),      # pooled conv1
            pltpu.VMEM((OH2 * B, OW2 * C2), jnp.float32),      # conv2 output
            pltpu.VMEM((PAD8, ENC_HIDDEN[0]), jnp.float32),    # conv_rep pad
        ],
        compiler_params=pltpu.CompilerParams(
            dimension_semantics=("arbitrary",)),
    )(*inputs)
    return out.reshape(B, n_tar, out_dim)


# ----------------------------------------------------------------------------
# Pure-JAX reference (mirrors the PyTorch module exactly) for validation
# ----------------------------------------------------------------------------
def reference_forward(params, conv_obs, cnmp_obs, cnmp_tar):
    hp = jax.lax.Precision.HIGHEST
    h = conv_obs
    n_conv = len(CONV_LAYERS)
    for i, (cin, cout, k, s, _pad) in enumerate(CONV_LAYERS):
        h = jax.lax.conv_general_dilated(
            h, params["conv_w"][i], window_strides=(s, s), padding="VALID",
            dimension_numbers=("NCHW", "OIHW", "NCHW"), precision=hp)
        h = jnp.maximum(h + params["conv_b"][i].reshape(1, -1, 1, 1), 0.0)
        if i < n_conv - 1:
            h = jax.lax.reduce_window(h, -jnp.inf, jax.lax.max,
                                      (1, 1, POOL_K, POOL_K),
                                      (1, 1, POOL_S, POOL_S), "VALID")
    B = h.shape[0]
    flat = h.reshape(B, -1)                               # NCHW flatten
    conv_result = jnp.matmul(flat, params["head_w"],
                             precision=hp) + params["head_b"]

    n_obs, n_tar = cnmp_obs.shape[1], cnmp_tar.shape[1]
    conv_rep = jnp.repeat(conv_result[:, None, :], n_obs, axis=1)
    x = jnp.concatenate([cnmp_obs, conv_rep], axis=-1)
    for i in range(len(params["enc_w"]) - 1):
        x = jnp.maximum(jnp.matmul(x, params["enc_w"][i], precision=hp)
                        + params["enc_b"][i], 0.0)
    x = jnp.matmul(x, params["enc_w"][-1], precision=hp) + params["enc_b"][-1]
    rep = x.mean(axis=1)
    rep_rep = jnp.repeat(rep[:, None, :], n_tar, axis=1)
    y = jnp.concatenate([rep_rep, cnmp_tar], axis=-1)
    for i in range(len(params["dec_w"]) - 1):
        y = jnp.maximum(jnp.matmul(y, params["dec_w"][i], precision=hp)
                        + params["dec_b"][i], 0.0)
    y = jnp.matmul(y, params["dec_w"][-1], precision=hp) + params["dec_b"][-1]
    return y


# ----------------------------------------------------------------------------
if __name__ == "__main__":
    key = jax.random.PRNGKey(0)
    k_param, k_img, k_obs, k_tar = jax.random.split(key, 4)

    params = init_params(k_param)
    prep = prepare_params(params)          # one-time weight layout prep

    B, N_OBS, N_TAR = 2, 8, 8
    conv_obs = jax.random.normal(k_img, (B, C0, IMG_H, IMG_W), jnp.float32)  # NCHW
    cnmp_obs = jax.random.normal(
        k_obs, (B, N_OBS, CNMP_INPUT_DIM + CNMP_OUTPUT_DIM), jnp.float32)
    cnmp_tar = jax.random.normal(k_tar, (B, N_TAR, CNMP_INPUT_DIM), jnp.float32)

    pred = conv_cnmp_forward(prep, conv_obs, cnmp_obs, cnmp_tar)
    pred = jax.block_until_ready(pred)

    assert pred.shape == (B, N_TAR, 2 * CNMP_OUTPUT_DIM), pred.shape
    assert bool(jnp.all(jnp.isfinite(pred)))

    # validate against a pure-JAX reference of the PyTorch module
    ref = reference_forward(params, conv_obs, cnmp_obs, cnmp_tar)
    err = float(jnp.sqrt(jnp.sum((pred - ref) ** 2)))
    den = float(jnp.sqrt(jnp.sum(ref ** 2))) + 1e-12
    assert err / den < 5e-2, f"relative error vs reference: {err / den}"

    print("KERNEL_OK")
</pallas_src>

<mosaic_0001>
module attributes {stable_mosaic.version = 11 : i64} {
  func.func @_conv_cnmp_kernel(%arg0: i32, %arg1: memref<16x48xf32, #tpu.memory_space<vmem>>, %arg2: memref<16x48xf32, #tpu.memory_space<vmem>>, %arg3: memref<16x8xf32, #tpu.memory_space<vmem>>, %arg4: memref<16x8xf32, #tpu.memory_space<vmem>>, %arg5: memref<16x8xf32, #tpu.memory_space<vmem>>, %arg6: memref<16x8xf32, #tpu.memory_space<vmem>>, %arg7: memref<8x16xf32, #tpu.memory_space<vmem>>, %arg8: memref<6x48x112xf32, #tpu.memory_space<vmem>>, %arg9: memref<1x112xf32, #tpu.memory_space<vmem>>, %arg10: memref<3x112x160xf32, #tpu.memory_space<vmem>>, %arg11: memref<1x160xf32, #tpu.memory_space<vmem>>, %arg12: memref<5x160x32xf32, #tpu.memory_space<vmem>>, %arg13: memref<1x32xf32, #tpu.memory_space<vmem>>, %arg14: memref<8x64xf32, #tpu.memory_space<vmem>>, %arg15: memref<32x64xf32, #tpu.memory_space<vmem>>, %arg16: memref<1x64xf32, #tpu.memory_space<vmem>>, %arg17: memref<3x64x64xf32, #tpu.memory_space<vmem>>, %arg18: memref<3x1x64xf32, #tpu.memory_space<vmem>>, %arg19: memref<64x64xf32, #tpu.memory_space<vmem>>, %arg20: memref<8x64xf32, #tpu.memory_space<vmem>>, %arg21: memref<1x64xf32, #tpu.memory_space<vmem>>, %arg22: memref<1x64x64xf32, #tpu.memory_space<vmem>>, %arg23: memref<1x1x64xf32, #tpu.memory_space<vmem>>, %arg24: memref<64x2xf32, #tpu.memory_space<vmem>>, %arg25: memref<1x2xf32, #tpu.memory_space<vmem>>, %arg26: memref<16x2xf32, #tpu.memory_space<vmem>>, %arg27: memref<14x112xf32, #tpu.memory_space<vmem>>, %arg28: memref<10x160xf32, #tpu.memory_space<vmem>>, %arg29: memref<8x64xf32, #tpu.memory_space<vmem>>) attributes {dimension_semantics = [#tpu.dimension_semantics<arbitrary>], iteration_bounds = array<i64: 1>, scalar_prefetch = 0 : i64, scratch_operands = 3 : i64, tpu.core_type = #tpu.core_type<tc>, window_params = [{pipeline_mode = #tpu.pipeline_mode<synchronous>, transform_indices = @transform_0, window_bounds = array<i64: 16, 48>}, {pipeline_mode = #tpu.pipeline_mode<synchronous>, transform_indices = @transform_1, window_bounds = array<i64: 16, 48>}, {pipeline_mode = #tpu.pipeline_mode<synchronous>, transform_indices = @transform_2, window_bounds = array<i64: 16, 8>}, {pipeline_mode = #tpu.pipeline_mode<synchronous>, transform_indices = @transform_3, window_bounds = array<i64: 16, 8>}, {pipeline_mode = #tpu.pipeline_mode<synchronous>, transform_indices = @transform_4, window_bounds = array<i64: 16, 8>}, {pipeline_mode = #tpu.pipeline_mode<synchronous>, transform_indices = @transform_5, window_bounds = array<i64: 16, 8>}, {pipeline_mode = #tpu.pipeline_mode<synchronous>, transform_indices = @transform_6, window_bounds = array<i64: 8, 16>}, {pipeline_mode = #tpu.pipeline_mode<synchronous>, transform_indices = @transform_7, window_bounds = array<i64: 6, 48, 112>}, {pipeline_mode = #tpu.pipeline_mode<synchronous>, transform_indices = @transform_8, window_bounds = array<i64: 1, 112>}, {pipeline_mode = #tpu.pipeline_mode<synchronous>, transform_indices = @transform_9, window_bounds = array<i64: 3, 112, 160>}, {pipeline_mode = #tpu.pipeline_mode<synchronous>, transform_indices = @transform_10, window_bounds = array<i64: 1, 160>}, {pipeline_mode = #tpu.pipeline_mode<synchronous>, transform_indices = @transform_11, window_bounds = array<i64: 5, 160, 32>}, {pipeline_mode = #tpu.pipeline_mode<synchronous>, transform_indices = @transform_12, window_bounds = array<i64: 1, 32>}, {pipeline_mode = #tpu.pipeline_mode<synchronous>, transform_indices = @transform_13, window_bounds = array<i64: 8, 64>}, {pipeline_mode = #tpu.pipeline_mode<synchronous>, transform_indices = @transform_14, window_bounds = array<i64: 32, 64>}, {pipeline_mode = #tpu.pipeline_mode<synchronous>, transform_indices = @transform_15, window_bounds = array<i64: 1, 64>}, {pipeline_mode = #tpu.pipeline_mode<synchronous>, transform_indices = @transform_16, window_bounds = array<i64: 3, 64, 64>}, {pipeline_mode = #tpu.pipeline_mode<synchronous>, transform_indices = @transform_17, window_bounds = array<i64: 3, 1, 64>}, {pipeline_mode = #tpu.pipeline_mode<synchronous>, transform_indices = @transform_18, window_bounds = array<i64: 64, 64>}, {pipeline_mode = #tpu.pipeline_mode<synchronous>, transform_indices = @transform_19, window_bounds = array<i64: 8, 64>}, {pipeline_mode = #tpu.pipeline_mode<synchronous>, transform_indices = @transform_20, window_bounds = array<i64: 1, 64>}, {pipeline_mode = #tpu.pipeline_mode<synchronous>, transform_indices = @transform_21, window_bounds = array<i64: 1, 64, 64>}, {pipeline_mode = #tpu.pipeline_mode<synchronous>, transform_indices = @transform_22, window_bounds = array<i64: 1, 1, 64>}, {pipeline_mode = #tpu.pipeline_mode<synchronous>, transform_indices = @transform_23, window_bounds = array<i64: 64, 2>}, {pipeline_mode = #tpu.pipeline_mode<synchronous>, transform_indices = @transform_24, window_bounds = array<i64: 1, 2>}, {pipeline_mode = #tpu.pipeline_mode<synchronous>, transform_indices = @transform_25, window_bounds = array<i64: 16, 2>}]} {
    %c0 = arith.constant 0 : index
    %c0_0 = arith.constant 0 : index
    %0 = vector.load %arg1[%c0, %c0_0] : memref<16x48xf32, #tpu.memory_space<vmem>>, vector<14x48xf32>
    %c0_1 = arith.constant 0 : index
    %c0_2 = arith.constant 0 : index
    %c0_3 = arith.constant 0 : index
    %1 = vector.load %arg8[%c0_1, %c0_2, %c0_3] : memref<6x48x112xf32, #tpu.memory_space<vmem>>, vector<1x48x112xf32>
    %2 = vector.shape_cast %1 : vector<1x48x112xf32> to vector<48x112xf32>
    %cst = arith.constant dense<0.000000e+00> : vector<14x112xf32>
    %3 = tpu.matmul %0, %2, %cst {dimension_numbers = #tpu.dot_dimension_numbers<[1], [0], [0], [1], [0, 0, 1, 1], [], []>} : vector<14x48xf32>, vector<48x112xf32>, vector<14x112xf32> -> vector<14x112xf32>
    %c0_4 = arith.constant 0 : index
    %c0_5 = arith.constant 0 : index
    %4 = vector.load %arg2[%c0_4, %c0_5] : memref<16x48xf32, #tpu.memory_space<vmem>>, vector<14x48xf32>
    %c2 = arith.constant 2 : index
    %c0_6 = arith.constant 0 : index
    %c0_7 = arith.constant 0 : index
    %5 = vector.load %arg8[%c2, %c0_6, %c0_7] : memref<6x48x112xf32, #tpu.memory_space<vmem>>, vector<1x48x112xf32>
    %6 = vector.shape_cast %5 : vector<1x48x112xf32> to vector<48x112xf32>
    %cst_8 = arith.constant dense<0.000000e+00> : vector<14x112xf32>
    %7 = tpu.matmul %4, %6, %cst_8 {dimension_numbers = #tpu.dot_dimension_numbers<[1], [0], [0], [1], [0, 0, 1, 1], [], []>} : vector<14x48xf32>, vector<48x112xf32>, vector<14x112xf32> -> vector<14x112xf32>
    %8 = arith.addf %3, %7 : vector<14x112xf32>
    %c2_9 = arith.constant 2 : index
    %c0_10 = arith.constant 0 : index
    %9 = vector.load %arg1[%c2_9, %c0_10] : memref<16x48xf32, #tpu.memory_space<vmem>>, vector<14x48xf32>
    %c4 = arith.constant 4 : index
    %c0_11 = arith.constant 0 : index
    %c0_12 = arith.constant 0 : index
    %10 = vector.load %arg8[%c4, %c0_11, %c0_12] : memref<6x48x112xf32, #tpu.memory_space<vmem>>, vector<1x48x112xf32>
    %11 = vector.shape_cast %10 : vector<1x48x112xf32> to vector<48x112xf32>
    %cst_13 = arith.constant dense<0.000000e+00> : vector<14x112xf32>
    %12 = tpu.matmul %9, %11, %cst_13 {dimension_numbers = #tpu.dot_dimension_numbers<[1], [0], [0], [1], [0, 0, 1, 1], [], []>} : vector<14x48xf32>, vector<48x112xf32>, vector<14x112xf32> -> vector<14x112xf32>
    %13 = arith.addf %8, %12 : vector<14x112xf32>
    %c0_14 = arith.constant 0 : index
    %c0_15 = arith.constant 0 : index
    %14 = vector.load %arg1[%c0_14, %c0_15] : memref<16x48xf32, #tpu.memory_space<vmem>>, vector<14x48xf32>
    %c1 = arith.constant 1 : index
    %c0_16 = arith.constant 0 : index
    %c0_17 = arith.constant 0 : index
    %15 = vector.load %arg8[%c1, %c0_16, %c0_17] : memref<6x48x112xf32, #tpu.memory_space<vmem>>, vector<1x48x112xf32>
    %16 = vector.shape_cast %15 : vector<1x48x112xf32> to vector<48x112xf32>
    %cst_18 = arith.constant dense<0.000000e+00> : vector<14x112xf32>
    %17 = tpu.matmul %14, %16, %cst_18 {dimension_numbers = #tpu.dot_dimension_numbers<[1], [0], [0], [1], [0, 0, 1, 1], [], []>} : vector<14x48xf32>, vector<48x112xf32>, vector<14x112xf32> -> vector<14x112xf32>
    %c0_19 = arith.constant 0 : index
    %c0_20 = arith.constant 0 : index
    %18 = vector.load %arg2[%c0_19, %c0_20] : memref<16x48xf32, #tpu.memory_space<vmem>>, vector<14x48xf32>
    %c3 = arith.constant 3 : index
    %c0_21 = arith.constant 0 : index
    %c0_22 = arith.constant 0 : index
    %19 = vector.load %arg8[%c3, %c0_21, %c0_22] : memref<6x48x112xf32, #tpu.memory_space<vmem>>, vector<1x48x112xf32>
    %20 = vector.shape_cast %19 : vector<1x48x112xf32> to vector<48x112xf32>
    %cst_23 = arith.constant dense<0.000000e+00> : vector<14x112xf32>
    %21 = tpu.matmul %18, %20, %cst_23 {dimension_numbers = #tpu.dot_dimension_numbers<[1], [0], [0], [1], [0, 0, 1, 1], [], []>} : vector<14x48xf32>, vector<48x112xf32>, vector<14x112xf32> -> vector<14x112xf32>
    %22 = arith.addf %17, %21 : vector<14x112xf32>
    %c2_24 = arith.constant 2 : index
    %c0_25 = arith.constant 0 : index
    %23 = vector.load %arg1[%c2_24, %c0_25] : memref<16x48xf32, #tpu.memory_space<vmem>>, vector<14x48xf32>
    %c5 = arith.constant 5 : index
    %c0_26 = arith.constant 0 : index
    %c0_27 = arith.constant 0 : index
    %24 = vector.load %arg8[%c5, %c0_26, %c0_27] : memref<6x48x112xf32, #tpu.memory_space<vmem>>, vector<1x48x112xf32>
    %25 = vector.shape_cast %24 : vector<1x48x112xf32> to vector<48x112xf32>
    %cst_28 = arith.constant dense<0.000000e+00> : vector<14x112xf32>
    %26 = tpu.matmul %23, %25, %cst_28 {dimension_numbers = #tpu.dot_dimension_numbers<[1], [0], [0], [1], [0, 0, 1, 1], [], []>} : vector<14x48xf32>, vector<48x112xf32>, vector<14x112xf32> -> vector<14x112xf32>
    %27 = arith.addf %22, %26 : vector<14x112xf32>
    %28 = arith.maximumf %13, %27 : vector<14x112xf32>
    %c0_29 = arith.constant 0 : index
    %c0_30 = arith.constant 0 : index
    %29 = vector.load %arg2[%c0_29, %c0_30] : memref<16x48xf32, #tpu.memory_space<vmem>>, vector<14x48xf32>
    %c0_31 = arith.constant 0 : index
    %c0_32 = arith.constant 0 : index
    %c0_33 = arith.constant 0 : index
    %30 = vector.load %arg8[%c0_31, %c0_32, %c0_33] : memref<6x48x112xf32, #tpu.memory_space<vmem>>, vector<1x48x112xf32>
    %31 = vector.shape_cast %30 : vector<1x48x112xf32> to vector<48x112xf32>
    %cst_34 = arith.constant dense<0.000000e+00> : vector<14x112xf32>
    %32 = tpu.matmul %29, %31, %cst_34 {dimension_numbers = #tpu.dot_dimension_numbers<[1], [0], [0], [1], [0, 0, 1, 1], [], []>} : vector<14x48xf32>, vector<48x112xf32>, vector<14x112xf32> -> vector<14x112xf32>
    %c2_35 = arith.constant 2 : index
    %c0_36 = arith.constant 0 : index
    %33 = vector.load %arg1[%c2_35, %c0_36] : memref<16x48xf32, #tpu.memory_space<vmem>>, vector<14x48xf32>
    %c2_37 = arith.constant 2 : index
    %c0_38 = arith.constant 0 : index
    %c0_39 = arith.constant 0 : index
    %34 = vector.load %arg8[%c2_37, %c0_38, %c0_39] : memref<6x48x112xf32, #tpu.memory_space<vmem>>, vector<1x48x112xf32>
    %35 = vector.shape_cast %34 : vector<1x48x112xf32> to vector<48x112xf32>
    %cst_40 = arith.constant dense<0.000000e+00> : vector<14x112xf32>
    %36 = tpu.matmul %33, %35, %cst_40 {dimension_numbers = #tpu.dot_dimension_numbers<[1], [0], [0], [1], [0, 0, 1, 1], [], []>} : vector<14x48xf32>, vector<48x112xf32>, vector<14x112xf32> -> vector<14x112xf32>
    %37 = arith.addf %32, %36 : vector<14x112xf32>
    %c2_41 = arith.constant 2 : index
    %c0_42 = arith.constant 0 : index
    %38 = vector.load %arg2[%c2_41, %c0_42] : memref<16x48xf32, #tpu.memory_space<vmem>>, vector<14x48xf32>
    %c4_43 = arith.constant 4 : index
    %c0_44 = arith.constant 0 : index
    %c0_45 = arith.constant 0 : index
    %39 = vector.load %arg8[%c4_43, %c0_44, %c0_45] : memref<6x48x112xf32, #tpu.memory_space<vmem>>, vector<1x48x112xf32>
    %40 = vector.shape_cast %39 : vector<1x48x112xf32> to vector<48x112xf32>
    %cst_46 = arith.constant dense<0.000000e+00> : vector<14x112xf32>
    %41 = tpu.matmul %38, %40, %cst_46 {dimension_numbers = #tpu.dot_dimension_numbers<[1], [0], [0], [1], [0, 0, 1, 1], [], []>} : vector<14x48xf32>, vector<48x112xf32>, vector<14x112xf32> -> vector<14x112xf32>
    %42 = arith.addf %37, %41 : vector<14x112xf32>
    %43 = arith.maximumf %28, %42 : vector<14x112xf32>
    %c0_47 = arith.constant 0 : index
    %c0_48 = arith.constant 0 : index
    %44 = vector.load %arg2[%c0_47, %c0_48] : memref<16x48xf32, #tpu.memory_space<vmem>>, vector<14x48xf32>
    %c1_49 = arith.constant 1 : index
    %c0_50 = arith.constant 0 : index
    %c0_51 = arith.constant 0 : index
    %45 = vector.load %arg8[%c1_49, %c0_50, %c0_51] : memref<6x48x112xf32, #tpu.memory_space<vmem>>, vector<1x48x112xf32>
    %46 = vector.shape_cast %45 : vector<1x48x112xf32> to vector<48x112xf32>
    %cst_52 = arith.constant dense<0.000000e+00> : vector<14x112xf32>
    %47 = tpu.matmul %44, %46, %cst_52 {dimension_numbers = #tpu.dot_dimension_numbers<[1], [0], [0], [1], [0, 0, 1, 1], [], []>} : vector<14x48xf32>, vector<48x112xf32>, vector<14x112xf32> -> vector<14x112xf32>
    %c2_53 = arith.constant 2 : index
    %c0_54 = arith.constant 0 : index
    %48 = vector.load %arg1[%c2_53, %c0_54] : memref<16x48xf32, #tpu.memory_space<vmem>>, vector<14x48xf32>
    %c3_55 = arith.constant 3 : index
    %c0_56 = arith.constant 0 : index
    %c0_57 = arith.constant 0 : index
    %49 = vector.load %arg8[%c3_55, %c0_56, %c0_57] : memref<6x48x112xf32, #tpu.memory_space<vmem>>, vector<1x48x112xf32>
    %50 = vector.shape_cast %49 : vector<1x48x112xf32> to vector<48x112xf32>
    %cst_58 = arith.constant dense<0.000000e+00> : vector<14x112xf32>
    %51 = tpu.matmul %48, %50, %cst_58 {dimension_numbers = #tpu.dot_dimension_numbers<[1], [0], [0], [1], [0, 0, 1, 1], [], []>} : vector<14x48xf32>, vector<48x112xf32>, vector<14x112xf32> -> vector<14x112xf32>
    %52 = arith.addf %47, %51 : vector<14x112xf32>
    %c2_59 = arith.constant 2 : index
    %c0_60 = arith.constant 0 : index
    %53 = vector.load %arg2[%c2_59, %c0_60] : memref<16x48xf32, #tpu.memory_space<vmem>>, vector<14x48xf32>
    %c5_61 = arith.constant 5 : index
    %c0_62 = arith.constant 0 : index
    %c0_63 = arith.constant 0 : index
    %54 = vector.load %arg8[%c5_61, %c0_62, %c0_63] : memref<6x48x112xf32, #tpu.memory_space<vmem>>, vector<1x48x112xf32>
    %55 = vector.shape_cast %54 : vector<1x48x112xf32> to vector<48x112xf32>
    %cst_64 = arith.constant dense<0.000000e+00> : vector<14x112xf32>
    %56 = tpu.matmul %53, %55, %cst_64 {dimension_numbers = #tpu.dot_dimension_numbers<[1], [0], [0], [1], [0, 0, 1, 1], [], []>} : vector<14x48xf32>, vector<48x112xf32>, vector<14x112xf32> -> vector<14x112xf32>
    %57 = arith.addf %52, %56 : vector<14x112xf32>
    %58 = arith.maximumf %43, %57 : vector<14x112xf32>
    %c0_65 = arith.constant 0 : index
    %c0_66 = arith.constant 0 : index
    %59 = vector.load %arg9[%c0_65, %c0_66] : memref<1x112xf32, #tpu.memory_space<vmem>>, vector<1x112xf32>
    %60 = vector.broadcast %59 : vector<1x112xf32> to vector<14x112xf32>
    %61 = arith.addf %58, %60 : vector<14x112xf32>
    %cst_67 = arith.constant 0.000000e+00 : f32
    %62 = vector.broadcast %cst_67 : f32 to vector<14x112xf32>
    %63 = arith.maximumf %61, %62 : vector<14x112xf32>
    %c0_68 = arith.constant 0 : index
    %c0_69 = arith.constant 0 : index
    %64 = vector.load %arg27[%c0_68, %c0_69] : memref<14x112xf32, #tpu.memory_space<vmem>>, vector<14x112xf32>
    tpu.vector_store %arg27[%c0_68, %c0_69], %63 {strides = array<i32>} : memref<14x112xf32, #tpu.memory_space<vmem>>, vector<14x112xf32>,
    %c0_70 = arith.constant 0 : index
    %c0_71 = arith.constant 0 : index
    %65 = vector.load %arg27[%c0_70, %c0_71] : memref<14x112xf32, #tpu.memory_space<vmem>>, vector<10x112xf32>
    %c0_72 = arith.constant 0 : index
    %c0_73 = arith.constant 0 : index
    %c0_74 = arith.constant 0 : index
    %66 = vector.load %arg10[%c0_72, %c0_73, %c0_74] : memref<3x112x160xf32, #tpu.memory_space<vmem>>, vector<1x112x160xf32>
    %67 = vector.shape_cast %66 : vector<1x112x160xf32> to vector<112x160xf32>
    %cst_75 = arith.constant dense<0.000000e+00> : vector<10x160xf32>
    %68 = tpu.matmul %65, %67, %cst_75 {dimension_numbers = #tpu.dot_dimension_numbers<[1], [0], [0], [1], [0, 0, 1, 1], [], []>} : vector<10x112xf32>, vector<112x160xf32>, vector<10x160xf32> -> vector<10x160xf32>
    %c2_76 = arith.constant 2 : index
    %c0_77 = arith.constant 0 : index
    %69 = vector.load %arg27[%c2_76, %c0_77] : memref<14x112xf32, #tpu.memory_space<vmem>>, vector<10x112xf32>
    %c1_78 = arith.constant 1 : index
    %c0_79 = arith.constant 0 : index
    %c0_80 = arith.constant 0 : index
    %70 = vector.load %arg10[%c1_78, %c0_79, %c0_80] : memref<3x112x160xf32, #tpu.memory_space<vmem>>, vector<1x112x160xf32>
    %71 = vector.shape_cast %70 : vector<1x112x160xf32> to vector<112x160xf32>
    %cst_81 = arith.constant dense<0.000000e+00> : vector<10x160xf32>
    %72 = tpu.matmul %69, %71, %cst_81 {dimension_numbers = #tpu.dot_dimension_numbers<[1], [0], [0], [1], [0, 0, 1, 1], [], []>} : vector<10x112xf32>, vector<112x160xf32>, vector<10x160xf32> -> vector<10x160xf32>
    %73 = arith.addf %68, %72 : vector<10x160xf32>
    %c4_82 = arith.constant 4 : index
    %c0_83 = arith.constant 0 : index
    %74 = vector.load %arg27[%c4_82, %c0_83] : memref<14x112xf32, #tpu.memory_space<vmem>>, vector<10x112xf32>
    %c2_84 = arith.constant 2 : index
    %c0_85 = arith.constant 0 : index
    %c0_86 = arith.constant 0 : index
    %75 = vector.load %arg10[%c2_84, %c0_85, %c0_86] : memref<3x112x160xf32, #tpu.memory_space<vmem>>, vector<1x112x160xf32>
    %76 = vector.shape_cast %75 : vector<1x112x160xf32> to vector<112x160xf32>
    %cst_87 = arith.constant dense<0.000000e+00> : vector<10x160xf32>
    %77 = tpu.matmul %74, %76, %cst_87 {dimension_numbers = #tpu.dot_dimension_numbers<[1], [0], [0], [1], [0, 0, 1, 1], [], []>} : vector<10x112xf32>, vector<112x160xf32>, vector<10x160xf32> -> vector<10x160xf32>
    %78 = arith.addf %73, %77 : vector<10x160xf32>
    %c0_88 = arith.constant 0 : index
    %c0_89 = arith.constant 0 : index
    %79 = vector.load %arg11[%c0_88, %c0_89] : memref<1x160xf32, #tpu.memory_space<vmem>>, vector<1x160xf32>
    %80 = vector.broadcast %79 : vector<1x160xf32> to vector<10x160xf32>
    %81 = arith.addf %78, %80 : vector<10x160xf32>
    %cst_90 = arith.constant 0.000000e+00 : f32
    %82 = vector.broadcast %cst_90 : f32 to vector<10x160xf32>
    %83 = arith.maximumf %81, %82 : vector<10x160xf32>
    %c0_91 = arith.constant 0 : index
    %c0_92 = arith.constant 0 : index
    %84 = vector.load %arg28[%c0_91, %c0_92] : memref<10x160xf32, #tpu.memory_space<vmem>>, vector<10x160xf32>
    tpu.vector_store %arg28[%c0_91, %c0_92], %83 {strides = array<i32>} : memref<10x160xf32, #tpu.memory_space<vmem>>, vector<10x160xf32>,
    %c0_93 = arith.constant 0 : index
    %c0_94 = arith.constant 0 : index
    %85 = vector.load %arg28[%c0_93, %c0_94] : memref<10x160xf32, #tpu.memory_space<vmem>>, vector<2x160xf32>
    %c0_95 = arith.constant 0 : index
    %c0_96 = arith.constant 0 : index
    %c0_97 = arith.constant 0 : index
    %86 = vector.load %arg12[%c0_95, %c0_96, %c0_97] : memref<5x160x32xf32, #tpu.memory_space<vmem>>, vector<1x160x32xf32>
    %87 = vector.shape_cast %86 : vector<1x160x32xf32> to vector<160x32xf32>
    %cst_98 = arith.constant dense<0.000000e+00> : vector<2x32xf32>
    %88 = tpu.matmul %85, %87, %cst_98 {dimension_numbers = #tpu.dot_dimension_numbers<[1], [0], [0], [1], [0, 0, 1, 1], [], []>} : vector<2x160xf32>, vector<160x32xf32>, vector<2x32xf32> -> vector<2x32xf32>
    %c2_99 = arith.constant 2 : index
    %c0_100 = arith.constant 0 : index
    %89 = vector.load %arg28[%c2_99, %c0_100] : memref<10x160xf32, #tpu.memory_space<vmem>>, vector<2x160xf32>
    %c1_101 = arith.constant 1 : index
    %c0_102 = arith.constant 0 : index
    %c0_103 = arith.constant 0 : index
    %90 = vector.load %arg12[%c1_101, %c0_102, %c0_103] : memref<5x160x32xf32, #tpu.memory_space<vmem>>, vector<1x160x32xf32>
    %91 = vector.shape_cast %90 : vector<1x160x32xf32> to vector<160x32xf32>
    %cst_104 = arith.constant dense<0.000000e+00> : vector<2x32xf32>
    %92 = tpu.matmul %89, %91, %cst_104 {dimension_numbers = #tpu.dot_dimension_numbers<[1], [0], [0], [1], [0, 0, 1, 1], [], []>} : vector<2x160xf32>, vector<160x32xf32>, vector<2x32xf32> -> vector<2x32xf32>
    %93 = arith.addf %88, %92 : vector<2x32xf32>
    %c4_105 = arith.constant 4 : index
    %c0_106 = arith.constant 0 : index
    %94 = vector.load %arg28[%c4_105, %c0_106] : memref<10x160xf32, #tpu.memory_space<vmem>>, vector<2x160xf32>
    %c2_107 = arith.constant 2 : index
    %c0_108 = arith.constant 0 : index
    %c0_109 = arith.constant 0 : index
    %95 = vector.load %arg12[%c2_107, %c0_108, %c0_109] : memref<5x160x32xf32, #tpu.memory_space<vmem>>, vector<1x160x32xf32>
    %96 = vector.shape_cast %95 : vector<1x160x32xf32> to vector<160x32xf32>
    %cst_110 = arith.constant dense<0.000000e+00> : vector<2x32xf32>
    %97 = tpu.matmul %94, %96, %cst_110 {dimension_numbers = #tpu.dot_dimension_numbers<[1], [0], [0], [1], [0, 0, 1, 1], [], []>} : vector<2x160xf32>, vector<160x32xf32>, vector<2x32xf32> -> vector<2x32xf32>
    %98 = arith.addf %93, %97 : vector<2x32xf32>
    %c6 = arith.constant 6 : index
    %c0_111 = arith.constant 0 : index
    %99 = vector.load %arg28[%c6, %c0_111] : memref<10x160xf32, #tpu.memory_space<vmem>>, vector<2x160xf32>
    %c3_112 = arith.constant 3 : index
    %c0_113 = arith.constant 0 : index
    %c0_114 = arith.constant 0 : index
    %100 = vector.load %arg12[%c3_112, %c0_113, %c0_114] : memref<5x160x32xf32, #tpu.memory_space<vmem>>, vector<1x160x32xf32>
    %101 = vector.shape_cast %100 : vector<1x160x32xf32> to vector<160x32xf32>
    %cst_115 = arith.constant dense<0.000000e+00> : vector<2x32xf32>
    %102 = tpu.matmul %99, %101, %cst_115 {dimension_numbers = #tpu.dot_dimension_numbers<[1], [0], [0], [1], [0, 0, 1, 1], [], []>} : vector<2x160xf32>, vector<160x32xf32>, vector<2x32xf32> -> vector<2x32xf32>
    %103 = arith.addf %98, %102 : vector<2x32xf32>
    %c8 = arith.constant 8 : index
    %c0_116 = arith.constant 0 : index
    %104 = vector.load %arg28[%c8, %c0_116] : memref<10x160xf32, #tpu.memory_space<vmem>>, vector<2x160xf32>
    %c4_117 = arith.constant 4 : index
    %c0_118 = arith.constant 0 : index
    %c0_119 = arith.constant 0 : index
    %105 = vector.load %arg12[%c4_117, %c0_118, %c0_119] : memref<5x160x32xf32, #tpu.memory_space<vmem>>, vector<1x160x32xf32>
    %106 = vector.shape_cast %105 : vector<1x160x32xf32> to vector<160x32xf32>
    %cst_120 = arith.constant dense<0.000000e+00> : vector<2x32xf32>
    %107 = tpu.matmul %104, %106, %cst_120 {dimension_numbers = #tpu.dot_dimension_numbers<[1], [0], [0], [1], [0, 0, 1, 1], [], []>} : vector<2x160xf32>, vector<160x32xf32>, vector<2x32xf32> -> vector<2x32xf32>
    %108 = arith.addf %103, %107 : vector<2x32xf32>
    %c0_121 = arith.constant 0 : index
    %c0_122 = arith.constant 0 : index
    %109 = vector.load %arg13[%c0_121, %c0_122] : memref<1x32xf32, #tpu.memory_space<vmem>>, vector<1x32xf32>
    %110 = vector.broadcast %109 : vector<1x32xf32> to vector<2x32xf32>
    %111 = arith.addf %108, %110 : vector<2x32xf32>
    %c0_123 = arith.constant 0 : index
    %c0_124 = arith.constant 0 : index
    %112 = vector.load %arg15[%c0_123, %c0_124] : memref<32x64xf32, #tpu.memory_space<vmem>>, vector<32x64xf32>
    %cst_125 = arith.constant dense<0.000000e+00> : vector<2x64xf32>
    %113 = tpu.matmul %111, %112, %cst_125 {dimension_numbers = #tpu.dot_dimension_numbers<[1], [0], [0], [1], [0, 0, 1, 1], [], []>} : vector<2x32xf32>, vector<32x64xf32>, vector<2x64xf32> -> vector<2x64xf32>
    %cst_126 = arith.constant 0.000000e+00 : f32
    %114 = vector.broadcast %cst_126 : f32 to vector<8x64xf32>
    %c0_127 = arith.constant 0 : index
    %c0_128 = arith.constant 0 : index
    %115 = vector.load %arg29[%c0_127, %c0_128] : memref<8x64xf32, #tpu.memory_space<vmem>>, vector<8x64xf32>
    tpu.vector_store %arg29[%c0_127, %c0_128], %114 {strides = array<i32>} : memref<8x64xf32, #tpu.memory_space<vmem>>, vector<8x64xf32>,
    %c0_129 = arith.constant 0 : index
    %c0_130 = arith.constant 0 : index
    %116 = vector.load %arg29[%c0_129, %c0_130] : memref<8x64xf32, #tpu.memory_space<vmem>>, vector<2x64xf32>
    tpu.vector_store %arg29[%c0_129, %c0_130], %113 {strides = array<i32>} : memref<8x64xf32, #tpu.memory_space<vmem>>, vector<2x64xf32>,
    %c0_131 = arith.constant 0 : index
    %c0_132 = arith.constant 0 : index
    %117 = vector.load %arg5[%c0_131, %c0_132] : memref<16x8xf32, #tpu.memory_space<vmem>>, vector<16x8xf32>
    %c0_133 = arith.constant 0 : index
    %c0_134 = arith.constant 0 : index
    %118 = vector.load %arg29[%c0_133, %c0_134] : memref<8x64xf32, #tpu.memory_space<vmem>>, vector<8x64xf32>
    %cst_135 = arith.constant dense<0.000000e+00> : vector<16x64xf32>
    %119 = tpu.matmul %117, %118, %cst_135 {dimension_numbers = #tpu.dot_dimension_numbers<[1], [0], [0], [1], [0, 0, 1, 1], [], []>} : vector<16x8xf32>, vector<8x64xf32>, vector<16x64xf32> -> vector<16x64xf32>
    %c0_136 = arith.constant 0 : index
    %c0_137 = arith.constant 0 : index
    %120 = vector.load %arg3[%c0_136, %c0_137] : memref<16x8xf32, #tpu.memory_space<vmem>>, vector<16x8xf32>
    %c0_138 = arith.constant 0 : index
    %c0_139 = arith.constant 0 : index
    %121 = vector.load %arg14[%c0_138, %c0_139] : memref<8x64xf32, #tpu.memory_space<vmem>>, vector<8x64xf32>
    %cst_140 = arith.constant dense<0.000000e+00> : vector<16x64xf32>
    %122 = tpu.matmul %120, %121, %cst_140 {dimension_numbers = #tpu.dot_dimension_numbers<[1], [0], [0], [1], [0, 0, 1, 1], [], []>} : vector<16x8xf32>, vector<8x64xf32>, vector<16x64xf32> -> vector<16x64xf32>
    %123 = arith.addf %122, %119 : vector<16x64xf32>
    %c0_141 = arith.constant 0 : index
    %c0_142 = arith.constant 0 : index
    %124 = vector.load %arg16[%c0_141, %c0_142] : memref<1x64xf32, #tpu.memory_space<vmem>>, vector<1x64xf32>
    %125 = vector.broadcast %124 : vector<1x64xf32> to vector<16x64xf32>
    %126 = arith.addf %123, %125 : vector<16x64xf32>
    %cst_143 = arith.constant 0.000000e+00 : f32
    %127 = vector.broadcast %cst_143 : f32 to vector<16x64xf32>
    %128 = arith.maximumf %126, %127 : vector<16x64xf32>
    %c0_144 = arith.constant 0 : index
    %c0_145 = arith.constant 0 : index
    %c0_146 = arith.constant 0 : index
    %129 = vector.load %arg17[%c0_144, %c0_145, %c0_146] : memref<3x64x64xf32, #tpu.memory_space<vmem>>, vector<1x64x64xf32>
    %130 = vector.shape_cast %129 : vector<1x64x64xf32> to vector<64x64xf32>
    %cst_147 = arith.constant dense<0.000000e+00> : vector<16x64xf32>
    %131 = tpu.matmul %128, %130, %cst_147 {dimension_numbers = #tpu.dot_dimension_numbers<[1], [0], [0], [1], [0, 0, 1, 1], [], []>} : vector<16x64xf32>, vector<64x64xf32>, vector<16x64xf32> -> vector<16x64xf32>
    %c0_148 = arith.constant 0 : index
    %c0_149 = arith.constant 0 : index
    %c0_150 = arith.constant 0 : index
    %132 = vector.load %arg18[%c0_148, %c0_149, %c0_150] : memref<3x1x64xf32, #tpu.memory_space<vmem>>, vector<1x1x64xf32>
    %133 = vector.shape_cast %132 : vector<1x1x64xf32> to vector<1x64xf32>
    %134 = vector.broadcast %133 : vector<1x64xf32> to vector<16x64xf32>
    %135 = arith.addf %131, %134 : vector<16x64xf32>
    %cst_151 = arith.constant 0.000000e+00 : f32
    %136 = vector.broadcast %cst_151 : f32 to vector<16x64xf32>
    %137 = arith.maximumf %135, %136 : vector<16x64xf32>
    %c1_152 = arith.constant 1 : index
    %c0_153 = arith.constant 0 : index
    %c0_154 = arith.constant 0 : index
    %138 = vector.load %arg17[%c1_152, %c0_153, %c0_154] : memref<3x64x64xf32, #tpu.memory_space<vmem>>, vector<1x64x64xf32>
    %139 = vector.shape_cast %138 : vector<1x64x64xf32> to vector<64x64xf32>
    %cst_155 = arith.constant dense<0.000000e+00> : vector<16x64xf32>
    %140 = tpu.matmul %137, %139, %cst_155 {dimension_numbers = #tpu.dot_dimension_numbers<[1], [0], [0], [1], [0, 0, 1, 1], [], []>} : vector<16x64xf32>, vector<64x64xf32>, vector<16x64xf32> -> vector<16x64xf32>
    %c1_156 = arith.constant 1 : index
    %c0_157 = arith.constant 0 : index
    %c0_158 = arith.constant 0 : index
    %141 = vector.load %arg18[%c1_156, %c0_157, %c0_158] : memref<3x1x64xf32, #tpu.memory_space<vmem>>, vector<1x1x64xf32>
    %142 = vector.shape_cast %141 : vector<1x1x64xf32> to vector<1x64xf32>
    %143 = vector.broadcast %142 : vector<1x64xf32> to vector<16x64xf32>
    %144 = arith.addf %140, %143 : vector<16x64xf32>
    %cst_159 = arith.constant 0.000000e+00 : f32
    %145 = vector.broadcast %cst_159 : f32 to vector<16x64xf32>
    %146 = arith.maximumf %144, %145 : vector<16x64xf32>
    %c2_160 = arith.constant 2 : index
    %c0_161 = arith.constant 0 : index
    %c0_162 = arith.constant 0 : index
    %147 = vector.load %arg17[%c2_160, %c0_161, %c0_162] : memref<3x64x64xf32, #tpu.memory_space<vmem>>, vector<1x64x64xf32>
    %148 = vector.shape_cast %147 : vector<1x64x64xf32> to vector<64x64xf32>
    %cst_163 = arith.constant dense<0.000000e+00> : vector<16x64xf32>
    %149 = tpu.matmul %146, %148, %cst_163 {dimension_numbers = #tpu.dot_dimension_numbers<[1], [0], [0], [1], [0, 0, 1, 1], [], []>} : vector<16x64xf32>, vector<64x64xf32>, vector<16x64xf32> -> vector<16x64xf32>
    %c2_164 = arith.constant 2 : index
    %c0_165 = arith.constant 0 : index
    %c0_166 = arith.constant 0 : index
    %150 = vector.load %arg18[%c2_164, %c0_165, %c0_166] : memref<3x1x64xf32, #tpu.memory_space<vmem>>, vector<1x1x64xf32>
    %151 = vector.shape_cast %150 : vector<1x1x64xf32> to vector<1x64xf32>
    %152 = vector.broadcast %151 : vector<1x64xf32> to vector<16x64xf32>
    %153 = arith.addf %149, %152 : vector<16x64xf32>
    %c0_167 = arith.constant 0 : index
    %c0_168 = arith.constant 0 : index
    %154 = vector.load %arg7[%c0_167, %c0_168] : memref<8x16xf32, #tpu.memory_space<vmem>>, vector<8x16xf32>
    %cst_169 = arith.constant dense<0.000000e+00> : vector<8x64xf32>
    %155 = tpu.matmul %154, %153, %cst_169 {dimension_numbers = #tpu.dot_dimension_numbers<[1], [0], [0], [1], [0, 0, 1, 1], [], []>} : vector<8x16xf32>, vector<16x64xf32>, vector<8x64xf32> -> vector<8x64xf32>
    %c0_170 = arith.constant 0 : index
    %c0_171 = arith.constant 0 : index
    %156 = vector.load %arg6[%c0_170, %c0_171] : memref<16x8xf32, #tpu.memory_space<vmem>>, vector<16x8xf32>
    %cst_172 = arith.constant dense<0.000000e+00> : vector<16x64xf32>
    %157 = tpu.matmul %156, %155, %cst_172 {dimension_numbers = #tpu.dot_dimension_numbers<[1], [0], [0], [1], [0, 0, 1, 1], [], []>} : vector<16x8xf32>, vector<8x64xf32>, vector<16x64xf32> -> vector<16x64xf32>
    %c0_173 = arith.constant 0 : index
    %c0_174 = arith.constant 0 : index
    %158 = vector.load %arg4[%c0_173, %c0_174] : memref<16x8xf32, #tpu.memory_space<vmem>>, vector<16x8xf32>
    %c0_175 = arith.constant 0 : index
    %c0_176 = arith.constant 0 : index
    %159 = vector.load %arg20[%c0_175, %c0_176] : memref<8x64xf32, #tpu.memory_space<vmem>>, vector<8x64xf32>
    %cst_177 = arith.constant dense<0.000000e+00> : vector<16x64xf32>
    %160 = tpu.matmul %158, %159, %cst_177 {dimension_numbers = #tpu.dot_dimension_numbers<[1], [0], [0], [1], [0, 0, 1, 1], [], []>} : vector<16x8xf32>, vector<8x64xf32>, vector<16x64xf32> -> vector<16x64xf32>
    %c0_178 = arith.constant 0 : index
    %c0_179 = arith.constant 0 : index
    %161 = vector.load %arg19[%c0_178, %c0_179] : memref<64x64xf32, #tpu.memory_space<vmem>>, vector<64x64xf32>
    %cst_180 = arith.constant dense<0.000000e+00> : vector<16x64xf32>
    %162 = tpu.matmul %157, %161, %cst_180 {dimension_numbers = #tpu.dot_dimension_numbers<[1], [0], [0], [1], [0, 0, 1, 1], [], []>} : vector<16x64xf32>, vector<64x64xf32>, vector<16x64xf32> -> vector<16x64xf32>
    %163 = arith.addf %160, %162 : vector<16x64xf32>
    %c0_181 = arith.constant 0 : index
    %c0_182 = arith.constant 0 : index
    %164 = vector.load %arg21[%c0_181, %c0_182] : memref<1x64xf32, #tpu.memory_space<vmem>>, vector<1x64xf32>
    %165 = vector.broadcast %164 : vector<1x64xf32> to vector<16x64xf32>
    %166 = arith.addf %163, %165 : vector<16x64xf32>
    %cst_183 = arith.constant 0.000000e+00 : f32
    %167 = vector.broadcast %cst_183 : f32 to vector<16x64xf32>
    %168 = arith.maximumf %166, %167 : vector<16x64xf32>
    %c0_184 = arith.constant 0 : index
    %c0_185 = arith.constant 0 : index
    %c0_186 = arith.constant 0 : index
    %169 = vector.load %arg22[%c0_184, %c0_185, %c0_186] : memref<1x64x64xf32, #tpu.memory_space<vmem>>, vector<1x64x64xf32>
    %170 = vector.shape_cast %169 : vector<1x64x64xf32> to vector<64x64xf32>
    %cst_187 = arith.constant dense<0.000000e+00> : vector<16x64xf32>
    %171 = tpu.matmul %168, %170, %cst_187 {dimension_numbers = #tpu.dot_dimension_numbers<[1], [0], [0], [1], [0, 0, 1, 1], [], []>} : vector<16x64xf32>, vector<64x64xf32>, vector<16x64xf32> -> vector<16x64xf32>
    %c0_188 = arith.constant 0 : index
    %c0_189 = arith.constant 0 : index
    %c0_190 = arith.constant 0 : index
    %172 = vector.load %arg23[%c0_188, %c0_189, %c0_190] : memref<1x1x64xf32, #tpu.memory_space<vmem>>, vector<1x1x64xf32>
    %173 = vector.shape_cast %172 : vector<1x1x64xf32> to vector<1x64xf32>
    %174 = vector.broadcast %173 : vector<1x64xf32> to vector<16x64xf32>
    %175 = arith.addf %171, %174 : vector<16x64xf32>
    %cst_191 = arith.constant 0.000000e+00 : f32
    %176 = vector.broadcast %cst_191 : f32 to vector<16x64xf32>
    %177 = arith.maximumf %175, %176 : vector<16x64xf32>
    %c0_192 = arith.constant 0 : index
    %c0_193 = arith.constant 0 : index
    %178 = vector.load %arg24[%c0_192, %c0_193] : memref<64x2xf32, #tpu.memory_space<vmem>>, vector<64x2xf32>
    %cst_194 = arith.constant dense<0.000000e+00> : vector<16x2xf32>
    %179 = tpu.matmul %177, %178, %cst_194 {dimension_numbers = #tpu.dot_dimension_numbers<[1], [0], [0], [1], [0, 0, 1, 1], [], []>} : vector<16x64xf32>, vector<64x2xf32>, vector<16x2xf32> -> vector<16x2xf32>
    %c0_195 = arith.constant 0 : index
    %c0_196 = arith.constant 0 : index
    %180 = vector.load %arg25[%c0_195, %c0_196] : memref<1x2xf32, #tpu.memory_space<vmem>>, vector<1x2xf32>
    %181 = vector.broadcast %180 : vector<1x2xf32> to vector<16x2xf32>
    %182 = arith.addf %179, %181 : vector<16x2xf32>
    %c0_197 = arith.constant 0 : index
    %c0_198 = arith.constant 0 : index
    %183 = vector.load %arg26[%c0_197, %c0_198] : memref<16x2xf32, #tpu.memory_space<vmem>>, vector<16x2xf32>
    tpu.vector_store %arg26[%c0_197, %c0_198], %182 {strides = array<i32>} : memref<16x2xf32, #tpu.memory_space<vmem>>, vector<16x2xf32>,
    return
  }
  func.func @transform_0(%arg0: i32) -> (i32, i32) {
    %c0_i32 = arith.constant 0 : i32
    %c0_i32_0 = arith.constant 0 : i32
    %c0_i32_1 = arith.constant 0 : i32
    return %c0_i32, %c0_i32_0 : i32, i32
  }
  func.func @transform_1(%arg0: i32) -> (i32, i32) {
    %c0_i32 = arith.constant 0 : i32
    %c0_i32_0 = arith.constant 0 : i32
    %c0_i32_1 = arith.constant 0 : i32
    return %c0_i32, %c0_i32_0 : i32, i32
  }
  func.func @transform_2(%arg0: i32) -> (i32, i32) {
    %c0_i32 = arith.constant 0 : i32
    %c0_i32_0 = arith.constant 0 : i32
    %c0_i32_1 = arith.constant 0 : i32
    return %c0_i32, %c0_i32_0 : i32, i32
  }
  func.func @transform_3(%arg0: i32) -> (i32, i32) {
    %c0_i32 = arith.constant 0 : i32
    %c0_i32_0 = arith.constant 0 : i32
    %c0_i32_1 = arith.constant 0 : i32
    return %c0_i32, %c0_i32_0 : i32, i32
  }
  func.func @transform_4(%arg0: i32) -> (i32, i32) {
    %c0_i32 = arith.constant 0 : i32
    %c0_i32_0 = arith.constant 0 : i32
    %c0_i32_1 = arith.constant 0 : i32
    return %c0_i32, %c0_i32_0 : i32, i32
  }
  func.func @transform_5(%arg0: i32) -> (i32, i32) {
    %c0_i32 = arith.constant 0 : i32
    %c0_i32_0 = arith.constant 0 : i32
    %c0_i32_1 = arith.constant 0 : i32
    return %c0_i32, %c0_i32_0 : i32, i32
  }
  func.func @transform_6(%arg0: i32) -> (i32, i32) {
    %c0_i32 = arith.constant 0 : i32
    %c0_i32_0 = arith.constant 0 : i32
    %c0_i32_1 = arith.constant 0 : i32
    return %c0_i32, %c0_i32_0 : i32, i32
  }
  func.func @transform_7(%arg0: i32) -> (i32, i32, i32) {
    %c0_i32 = arith.constant 0 : i32
    %c0_i32_0 = arith.constant 0 : i32
    %c0_i32_1 = arith.constant 0 : i32
    %c0_i32_2 = arith.constant 0 : i32
    return %c0_i32, %c0_i32_0, %c0_i32_1 : i32, i32, i32
  }
  func.func @transform_8(%arg0: i32) -> (i32, i32) {
    %c0_i32 = arith.constant 0 : i32
    %c0_i32_0 = arith.constant 0 : i32
    %c0_i32_1 = arith.constant 0 : i32
    return %c0_i32, %c0_i32_0 : i32, i32
  }
  func.func @transform_9(%arg0: i32) -> (i32, i32, i32) {
    %c0_i32 = arith.constant 0 : i32
    %c0_i32_0 = arith.constant 0 : i32
    %c0_i32_1 = arith.constant 0 : i32
    %c0_i32_2 = arith.constant 0 : i32
    return %c0_i32, %c0_i32_0, %c0_i32_1 : i32, i32, i32
  }
  func.func @transform_10(%arg0: i32) -> (i32, i32) {
    %c0_i32 = arith.constant 0 : i32
    %c0_i32_0 = arith.constant 0 : i32
    %c0_i32_1 = arith.constant 0 : i32
    return %c0_i32, %c0_i32_0 : i32, i32
  }
  func.func @transform_11(%arg0: i32) -> (i32, i32, i32) {
    %c0_i32 = arith.constant 0 : i32
    %c0_i32_0 = arith.constant 0 : i32
    %c0_i32_1 = arith.constant 0 : i32
    %c0_i32_2 = arith.constant 0 : i32
    return %c0_i32, %c0_i32_0, %c0_i32_1 : i32, i32, i32
  }
  func.func @transform_12(%arg0: i32) -> (i32, i32) {
    %c0_i32 = arith.constant 0 : i32
    %c0_i32_0 = arith.constant 0 : i32
    %c0_i32_1 = arith.constant 0 : i32
    return %c0_i32, %c0_i32_0 : i32, i32
  }
  func.func @transform_13(%arg0: i32) -> (i32, i32) {
    %c0_i32 = arith.constant 0 : i32
    %c0_i32_0 = arith.constant 0 : i32
    %c0_i32_1 = arith.constant 0 : i32
    return %c0_i32, %c0_i32_0 : i32, i32
  }
  func.func @transform_14(%arg0: i32) -> (i32, i32) {
    %c0_i32 = arith.constant 0 : i32
    %c0_i32_0 = arith.constant 0 : i32
    %c0_i32_1 = arith.constant 0 : i32
    return %c0_i32, %c0_i32_0 : i32, i32
  }
  func.func @transform_15(%arg0: i32) -> (i32, i32) {
    %c0_i32 = arith.constant 0 : i32
    %c0_i32_0 = arith.constant 0 : i32
    %c0_i32_1 = arith.constant 0 : i32
    return %c0_i32, %c0_i32_0 : i32, i32
  }
  func.func @transform_16(%arg0: i32) -> (i32, i32, i32) {
    %c0_i32 = arith.constant 0 : i32
    %c0_i32_0 = arith.constant 0 : i32
    %c0_i32_1 = arith.constant 0 : i32
    %c0_i32_2 = arith.constant 0 : i32
    return %c0_i32, %c0_i32_0, %c0_i32_1 : i32, i32, i32
  }
  func.func @transform_17(%arg0: i32) -> (i32, i32, i32) {
    %c0_i32 = arith.constant 0 : i32
    %c0_i32_0 = arith.constant 0 : i32
    %c0_i32_1 = arith.constant 0 : i32
    %c0_i32_2 = arith.constant 0 : i32
    return %c0_i32, %c0_i32_0, %c0_i32_1 : i32, i32, i32
  }
  func.func @transform_18(%arg0: i32) -> (i32, i32) {
    %c0_i32 = arith.constant 0 : i32
    %c0_i32_0 = arith.constant 0 : i32
    %c0_i32_1 = arith.constant 0 : i32
    return %c0_i32, %c0_i32_0 : i32, i32
  }
  func.func @transform_19(%arg0: i32) -> (i32, i32) {
    %c0_i32 = arith.constant 0 : i32
    %c0_i32_0 = arith.constant 0 : i32
    %c0_i32_1 = arith.constant 0 : i32
    return %c0_i32, %c0_i32_0 : i32, i32
  }
  func.func @transform_20(%arg0: i32) -> (i32, i32) {
    %c0_i32 = arith.constant 0 : i32
    %c0_i32_0 = arith.constant 0 : i32
    %c0_i32_1 = arith.constant 0 : i32
    return %c0_i32, %c0_i32_0 : i32, i32
  }
  func.func @transform_21(%arg0: i32) -> (i32, i32, i32) {
    %c0_i32 = arith.constant 0 : i32
    %c0_i32_0 = arith.constant 0 : i32
    %c0_i32_1 = arith.constant 0 : i32
    %c0_i32_2 = arith.constant 0 : i32
    return %c0_i32, %c0_i32_0, %c0_i32_1 : i32, i32, i32
  }
  func.func @transform_22(%arg0: i32) -> (i32, i32, i32) {
    %c0_i32 = arith.constant 0 : i32
    %c0_i32_0 = arith.constant 0 : i32
    %c0_i32_1 = arith.constant 0 : i32
    %c0_i32_2 = arith.constant 0 : i32
    return %c0_i32, %c0_i32_0, %c0_i32_1 : i32, i32, i32
  }
  func.func @transform_23(%arg0: i32) -> (i32, i32) {
    %c0_i32 = arith.constant 0 : i32
    %c0_i32_0 = arith.constant 0 : i32
    %c0_i32_1 = arith.constant 0 : i32
    return %c0_i32, %c0_i32_0 : i32, i32
  }
  func.func @transform_24(%arg0: i32) -> (i32, i32) {
    %c0_i32 = arith.constant 0 : i32
    %c0_i32_0 = arith.constant 0 : i32
    %c0_i32_1 = arith.constant 0 : i32
    return %c0_i32, %c0_i32_0 : i32, i32
  }
  func.func @transform_25(%arg0: i32) -> (i32, i32) {
    %c0_i32 = arith.constant 0 : i32
    %c0_i32_0 = arith.constant 0 : i32
    %c0_i32_1 = arith.constant 0 : i32
    return %c0_i32, %c0_i32_0 : i32, i32
  }
}

</mosaic_0001>

<llo_original>
// kernel: conv_cnmp_forward.1
$region0: #{conv_cnmp_forward.1}
  #allocation0 [shape = 'u32[]', space=smem, size = 0x4, offset = 0x4, fixed_abs, tag = 'smem constant byte address 0x4 - core index']
  #allocation1 [shape = 'u32[72,128]{1,0:T(1,128)}', space=vmem, size = 0x9000, scoped, tag = 'internal scratch']
  #allocation2 [shape = 'f32[14,112]{1,0:T(8,128)}', space=vmem, size = 0x2000, scoped, tag = 'scratch operand']
  #allocation3 [shape = 'f32[10,160]{1,0:T(8,128)}', space=vmem, size = 0x4000, scoped, tag = 'scratch operand']
  #allocation4 [shape = 'f32[8,64]{1,0:T(8,128)}', space=vmem, size = 0x1000, scoped, tag = 'scratch operand']
  %s0 = inlined_call_operand.vmem [shape: f32[16,48], index: 0, kind: input, shape index: {}]
  %s1 = inlined_call_operand.vmem [shape: f32[16,48], index: 1, kind: input, shape index: {}]
  %s2 = inlined_call_operand.vmem [shape: f32[16,8], index: 2, kind: input, shape index: {}]
  %s3 = inlined_call_operand.vmem [shape: f32[16,8], index: 3, kind: input, shape index: {}]
  %s4 = inlined_call_operand.vmem [shape: f32[16,8], index: 4, kind: input, shape index: {}, may-alias: {4,5}]
  %s5 = inlined_call_operand.vmem [shape: f32[16,8], index: 5, kind: input, shape index: {}, may-alias: {4,5}]
  %s6 = inlined_call_operand.vmem [shape: f32[8,16], index: 6, kind: input, shape index: {}]
  %s7 = inlined_call_operand.vmem [shape: f32[6,48,112], index: 7, kind: input, shape index: {}]
  %s8 = inlined_call_operand.vmem [shape: f32[1,112], index: 8, kind: input, shape index: {}]
  %s9 = inlined_call_operand.vmem [shape: f32[3,112,160], index: 9, kind: input, shape index: {}]
  %s10 = inlined_call_operand.vmem [shape: f32[1,160], index: 10, kind: input, shape index: {}]
  %s11 = inlined_call_operand.vmem [shape: f32[5,160,32], index: 11, kind: input, shape index: {}]
  %s12 = inlined_call_operand.vmem [shape: f32[1,32], index: 12, kind: input, shape index: {}]
  %s13 = inlined_call_operand.vmem [shape: f32[8,64], index: 13, kind: input, shape index: {}]
  %s14 = inlined_call_operand.vmem [shape: f32[32,64], index: 14, kind: input, shape index: {}]
  %s15 = inlined_call_operand.vmem [shape: f32[1,64], index: 15, kind: input, shape index: {}]
  %s16 = inlined_call_operand.vmem [shape: f32[3,64,64], index: 16, kind: input, shape index: {}]
  %s17 = inlined_call_operand.vmem [shape: f32[3,1,64], index: 17, kind: input, shape index: {}]
  %s18 = inlined_call_operand.vmem [shape: f32[64,64], index: 18, kind: input, shape index: {}]
  %s19 = inlined_call_operand.vmem [shape: f32[8,64], index: 19, kind: input, shape index: {}]
  %s20 = inlined_call_operand.vmem [shape: f32[1,64], index: 20, kind: input, shape index: {}]
  %s21 = inlined_call_operand.vmem [shape: f32[1,64,64], index: 21, kind: input, shape index: {}]
  %s22 = inlined_call_operand.vmem [shape: f32[1,1,64], index: 22, kind: input, shape index: {}]
  %s23 = inlined_call_operand.vmem [shape: f32[64,2], index: 23, kind: input, shape index: {}]
  %s24 = inlined_call_operand.vmem [shape: f32[1,2], index: 24, kind: input, shape index: {}]
  %s25 = inlined_call_operand.vmem [shape: f32[16,2], index: 25, kind: output, shape index: {}]
  %s26 = sld [smem:[#allocation0]]
  $region110: #{conv_cnmp_forward.1} parent=0
    _
  %s28 = ssub.s32 1, %s26
  %s29 = scalar_select 0, %s28, %s26
  // Predicated region
  $region2: #{conv_cnmp_forward.1} parent=0 // pred_check
    _
  $region3: #{conv_cnmp_forward.1} parent=0 // pred_check_branch
    %31 = sbr.rel (0) target = $region5
  $region4: #{conv_cnmp_forward.1} parent=0 // pred_region
    _
  $region5: #{conv_cnmp_forward.1} parent=0 // pred_fallthru
    _
  // Predicated region
  $region6: #{conv_cnmp_forward.1} parent=0 // pred_check
    _
  $region7: #{conv_cnmp_forward.1} parent=0 // pred_check_branch
    %33 = sbr.rel (0) target = $region9
  $region8: #{conv_cnmp_forward.1} parent=0 // pred_region
    _
  $region9: #{conv_cnmp_forward.1} parent=0 // pred_fallthru
    _
  // Predicated region
  $region10: #{conv_cnmp_forward.1} parent=0 // pred_check
    _
  $region11: #{conv_cnmp_forward.1} parent=0 // pred_check_branch
    %35 = sbr.rel (0) target = $region13
  $region12: #{conv_cnmp_forward.1} parent=0 // pred_region
    _
  $region13: #{conv_cnmp_forward.1} parent=0 // pred_fallthru
    _
  // Predicated region
  $region14: #{conv_cnmp_forward.1} parent=0 // pred_check
    _
  $region15: #{conv_cnmp_forward.1} parent=0 // pred_check_branch
    %37 = sbr.rel (0) target = $region17
  $region16: #{conv_cnmp_forward.1} parent=0 // pred_region
    _
  $region17: #{conv_cnmp_forward.1} parent=0 // pred_fallthru
    _
  // Predicated region
  $region18: #{conv_cnmp_forward.1} parent=0 // pred_check
    _
  $region19: #{conv_cnmp_forward.1} parent=0 // pred_check_branch
    %39 = sbr.rel (0) target = $region21
  $region20: #{conv_cnmp_forward.1} parent=0 // pred_region
    _
  $region21: #{conv_cnmp_forward.1} parent=0 // pred_fallthru
    _
  // Predicated region
  $region22: #{conv_cnmp_forward.1} parent=0 // pred_check
    _
  $region23: #{conv_cnmp_forward.1} parent=0 // pred_check_branch
    %41 = sbr.rel (0) target = $region25
  $region24: #{conv_cnmp_forward.1} parent=0 // pred_region
    _
  $region25: #{conv_cnmp_forward.1} parent=0 // pred_fallthru
    _
  // Predicated region
  $region26: #{conv_cnmp_forward.1} parent=0 // pred_check
    _
  $region27: #{conv_cnmp_forward.1} parent=0 // pred_check_branch
    %43 = sbr.rel (0) target = $region29
  $region28: #{conv_cnmp_forward.1} parent=0 // pred_region
    _
  $region29: #{conv_cnmp_forward.1} parent=0 // pred_fallthru
    _
  // Predicated region
  $region30: #{conv_cnmp_forward.1} parent=0 // pred_check
    _
  $region31: #{conv_cnmp_forward.1} parent=0 // pred_check_branch
    %45 = sbr.rel (0) target = $region33
  $region32: #{conv_cnmp_forward.1} parent=0 // pred_region
    _
  $region33: #{conv_cnmp_forward.1} parent=0 // pred_fallthru
    _
  // Predicated region
  $region34: #{conv_cnmp_forward.1} parent=0 // pred_check
    _
  $region35: #{conv_cnmp_forward.1} parent=0 // pred_check_branch
    %47 = sbr.rel (0) target = $region37
  $region36: #{conv_cnmp_forward.1} parent=0 // pred_region
    _
  $region37: #{conv_cnmp_forward.1} parent=0 // pred_fallthru
    _
  // Predicated region
  $region38: #{conv_cnmp_forward.1} parent=0 // pred_check
    _
  $region39: #{conv_cnmp_forward.1} parent=0 // pred_check_branch
    %49 = sbr.rel (0) target = $region41
  $region40: #{conv_cnmp_forward.1} parent=0 // pred_region
    _
  $region41: #{conv_cnmp_forward.1} parent=0 // pred_fallthru
    _
  // Predicated region
  $region42: #{conv_cnmp_forward.1} parent=0 // pred_check
    _
  $region43: #{conv_cnmp_forward.1} parent=0 // pred_check_branch
    %51 = sbr.rel (0) target = $region45
  $region44: #{conv_cnmp_forward.1} parent=0 // pred_region
    _
  $region45: #{conv_cnmp_forward.1} parent=0 // pred_fallthru
    _
  // Predicated region
  $region46: #{conv_cnmp_forward.1} parent=0 // pred_check
    _
  $region47: #{conv_cnmp_forward.1} parent=0 // pred_check_branch
    %53 = sbr.rel (0) target = $region49
  $region48: #{conv_cnmp_forward.1} parent=0 // pred_region
    _
  $region49: #{conv_cnmp_forward.1} parent=0 // pred_fallthru
    _
  // Predicated region
  $region50: #{conv_cnmp_forward.1} parent=0 // pred_check
    _
  $region51: #{conv_cnmp_forward.1} parent=0 // pred_check_branch
    %55 = sbr.rel (0) target = $region53
  $region52: #{conv_cnmp_forward.1} parent=0 // pred_region
    _
  $region53: #{conv_cnmp_forward.1} parent=0 // pred_fallthru
    _
  // Predicated region
  $region54: #{conv_cnmp_forward.1} parent=0 // pred_check
    _
  $region55: #{conv_cnmp_forward.1} parent=0 // pred_check_branch
    %57 = sbr.rel (0) target = $region57
  $region56: #{conv_cnmp_forward.1} parent=0 // pred_region
    _
  $region57: #{conv_cnmp_forward.1} parent=0 // pred_fallthru
    _
  // Predicated region
  $region58: #{conv_cnmp_forward.1} parent=0 // pred_check
    _
  $region59: #{conv_cnmp_forward.1} parent=0 // pred_check_branch
    %59 = sbr.rel (0) target = $region61
  $region60: #{conv_cnmp_forward.1} parent=0 // pred_region
    _
  $region61: #{conv_cnmp_forward.1} parent=0 // pred_fallthru
    _
  // Predicated region
  $region62: #{conv_cnmp_forward.1} parent=0 // pred_check
    _
  $region63: #{conv_cnmp_forward.1} parent=0 // pred_check_branch
    %61 = sbr.rel (0) target = $region65
  $region64: #{conv_cnmp_forward.1} parent=0 // pred_region
    _
  $region65: #{conv_cnmp_forward.1} parent=0 // pred_fallthru
    _
  // Predicated region
  $region66: #{conv_cnmp_forward.1} parent=0 // pred_check
    _
  $region67: #{conv_cnmp_forward.1} parent=0 // pred_check_branch
    %63 = sbr.rel (0) target = $region69
  $region68: #{conv_cnmp_forward.1} parent=0 // pred_region
    _
  $region69: #{conv_cnmp_forward.1} parent=0 // pred_fallthru
    _
  // Predicated region
  $region70: #{conv_cnmp_forward.1} parent=0 // pred_check
    _
  $region71: #{conv_cnmp_forward.1} parent=0 // pred_check_branch
    %65 = sbr.rel (0) target = $region73
  $region72: #{conv_cnmp_forward.1} parent=0 // pred_region
    _
  $region73: #{conv_cnmp_forward.1} parent=0 // pred_fallthru
    _
  // Predicated region
  $region74: #{conv_cnmp_forward.1} parent=0 // pred_check
    _
  $region75: #{conv_cnmp_forward.1} parent=0 // pred_check_branch
    %67 = sbr.rel (0) target = $region77
  $region76: #{conv_cnmp_forward.1} parent=0 // pred_region
    _
  $region77: #{conv_cnmp_forward.1} parent=0 // pred_fallthru
    _
  // Predicated region
  $region78: #{conv_cnmp_forward.1} parent=0 // pred_check
    _
  $region79: #{conv_cnmp_forward.1} parent=0 // pred_check_branch
    %69 = sbr.rel (0) target = $region81
  $region80: #{conv_cnmp_forward.1} parent=0 // pred_region
    _
  $region81: #{conv_cnmp_forward.1} parent=0 // pred_fallthru
    _
  // Predicated region
  $region82: #{conv_cnmp_forward.1} parent=0 // pred_check
    _
  $region83: #{conv_cnmp_forward.1} parent=0 // pred_check_branch
    %71 = sbr.rel (0) target = $region85
  $region84: #{conv_cnmp_forward.1} parent=0 // pred_region
    _
  $region85: #{conv_cnmp_forward.1} parent=0 // pred_fallthru
    _
  // Predicated region
  $region86: #{conv_cnmp_forward.1} parent=0 // pred_check
    _
  $region87: #{conv_cnmp_forward.1} parent=0 // pred_check_branch
    %73 = sbr.rel (0) target = $region89
  $region88: #{conv_cnmp_forward.1} parent=0 // pred_region
    _
  $region89: #{conv_cnmp_forward.1} parent=0 // pred_fallthru
    _
  // Predicated region
  $region90: #{conv_cnmp_forward.1} parent=0 // pred_check
    _
  $region91: #{conv_cnmp_forward.1} parent=0 // pred_check_branch
    %75 = sbr.rel (0) target = $region93
  $region92: #{conv_cnmp_forward.1} parent=0 // pred_region
    _
  $region93: #{conv_cnmp_forward.1} parent=0 // pred_fallthru
    _
  // Predicated region
  $region94: #{conv_cnmp_forward.1} parent=0 // pred_check
    _
  $region95: #{conv_cnmp_forward.1} parent=0 // pred_check_branch
    %77 = sbr.rel (0) target = $region97
  $region96: #{conv_cnmp_forward.1} parent=0 // pred_region
    _
  $region97: #{conv_cnmp_forward.1} parent=0 // pred_fallthru
    _
  // Predicated region
  $region98: #{conv_cnmp_forward.1} parent=0 // pred_check
    _
  $region99: #{conv_cnmp_forward.1} parent=0 // pred_check_branch
    %79 = sbr.rel (0) target = $region101
  $region100: #{conv_cnmp_forward.1} parent=0 // pred_region
    _
  $region101: #{conv_cnmp_forward.1} parent=0 // pred_fallthru
    _
  %v80 = vld [vmem:[%s0] sm:$0xff]
  %v81 = vld [vmem:[%s0 + $0x8] sm:$0x3f]
  %v82 = vld [vmem:[%s7] sm:$0xff]
  %v83 = vld [vmem:[%s7 + $0x8] sm:$0xff]
  %v84 = vld [vmem:[%s7 + $0x10] sm:$0xff]
  %v85 = vld [vmem:[%s7 + $0x18] sm:$0xff]
  %v86 = vld [vmem:[%s7 + $0x20] sm:$0xff]
  %v87 = vld [vmem:[%s7 + $0x28] sm:$0xff]
  %v88 = vld [vmem:[%s1] sm:$0xff]
  %v89 = vld [vmem:[%s1 + $0x8] sm:$0x3f]
  %s90 = scalar_lea.vmem %s7, 96
  %v91 = vld [vmem:[%s90] sm:$0xff]
  %v92 = vld [vmem:[%s90 + $0x8] sm:$0xff]
  %v93 = vld [vmem:[%s90 + $0x10] sm:$0xff]
  %v94 = vld [vmem:[%s90 + $0x18] sm:$0xff]
  %v95 = vld [vmem:[%s90 + $0x20] sm:$0xff]
  %v96 = vld [vmem:[%s90 + $0x28] sm:$0xff]
  %vm97 = vcmask 392192
  %v99 = vsel %vm97, %v88, 0
  %v102 = vsel %vm97, %v89, 0
  %104 = vmatpush.msra.mxu0 0.0
  %105 = vmatpush.msra.mxu0 0.0
  %106 = vmatpush.msra.mxu0 0.0
  %107 = vmatpush.msra.mxu0 0.0
  %108 = vmatpush.msra.mxu0 0.0
  %109 = vmatpush.msra.mxu0 0.0
  %110 = vmatpush.msra.mxu0 0.0
  %111 = vmatpush.msra.mxu0 0.0
  %112 = vmatpush.msra.mxu0 0.0
  %113 = vmatpush.msra.mxu0 0.0
  %114 = vmatpush.msra.mxu0 %v96
  %115 = vmatpush.msra.mxu0 %v95
  %116 = vmatpush.msra.mxu0 %v94
  %117 = vmatpush.msra.mxu0 %v93
  %118 = vmatpush.msra.mxu0 %v92
  %119 = vmatpush.msra.mxu0 %v91
  %120 = vmatmul.f32.gmra.mxu0 %v99
  %v121 = vpop.f32.mrf.mxu0
  %v122 = vadd.f32 0.0, %v121
  %123 = vmatmul.f32.gmra.mxu0 %v102
  %v124 = vpop.f32.mrf.mxu0
  %v125 = vadd.f32 0.0, %v124
  %126 = vdwg.mxu0
  %v128 = vsel %vm97, %v80, 0
  %v131 = vsel %vm97, %v81, 0
  %133 = vmatpush.msra.mxu0 0.0
  %134 = vmatpush.msra.mxu0 0.0
  %135 = vmatpush.msra.mxu0 0.0
  %136 = vmatpush.msra.mxu0 0.0
  %137 = vmatpush.msra.mxu0 0.0
  %138 = vmatpush.msra.mxu0 0.0
  %139 = vmatpush.msra.mxu0 0.0
  %140 = vmatpush.msra.mxu0 0.0
  %141 = vmatpush.msra.mxu0 0.0
  %142 = vmatpush.msra.mxu0 0.0
  %143 = vmatpush.msra.mxu0 %v87
  %144 = vmatpush.msra.mxu0 %v86
  %145 = vmatpush.msra.mxu0 %v85
  %146 = vmatpush.msra.mxu0 %v84
  %147 = vmatpush.msra.mxu0 %v83
  %148 = vmatpush.msra.mxu0 %v82
  %149 = vmatmul.f32.gmra.mxu0 %v128
  %v150 = vpop.f32.mrf.mxu0
  %v151 = vadd.f32 %v122, %v150
  %152 = vmatmul.f32.gmra.mxu0 %v131
  %v153 = vpop.f32.mrf.mxu0
  %v154 = vadd.f32 %v125, %v153
  %155 = vdwg.mxu0
  %v156 = vld [vmem:[%s0 + $0x2] sm:$0xff]
  %v157 = vld [vmem:[%s0 + $0xa] sm:$0x3f]
  %s158 = scalar_lea.vmem %s7, 192
  %v159 = vld [vmem:[%s158] sm:$0xff]
  %v160 = vld [vmem:[%s158 + $0x8] sm:$0xff]
  %v161 = vld [vmem:[%s158 + $0x10] sm:$0xff]
  %v162 = vld [vmem:[%s158 + $0x18] sm:$0xff]
  %v163 = vld [vmem:[%s158 + $0x20] sm:$0xff]
  %v164 = vld [vmem:[%s158 + $0x28] sm:$0xff]
  %v166 = vsel %vm97, %v156, 0
  %v169 = vsel %vm97, %v157, 0
  %171 = vmatpush.msra.mxu0 0.0
  %172 = vmatpush.msra.mxu0 0.0
  %173 = vmatpush.msra.mxu0 0.0
  %174 = vmatpush.msra.mxu0 0.0
  %175 = vmatpush.msra.mxu0 0.0
  %176 = vmatpush.msra.mxu0 0.0
  %177 = vmatpush.msra.mxu0 0.0
  %178 = vmatpush.msra.mxu0 0.0
  %179 = vmatpush.msra.mxu0 0.0
  %180 = vmatpush.msra.mxu0 0.0
  %181 = vmatpush.msra.mxu0 %v164
  %182 = vmatpush.msra.mxu0 %v163
  %183 = vmatpush.msra.mxu0 %v162
  %184 = vmatpush.msra.mxu0 %v161
  %185 = vmatpush.msra.mxu0 %v160
  %186 = vmatpush.msra.mxu0 %v159
  %187 = vmatmul.f32.gmra.mxu0 %v166
  %v188 = vpop.f32.mrf.mxu0
  %v189 = vadd.f32 0.0, %v188
  %190 = vmatmul.f32.gmra.mxu0 %v169
  %v191 = vpop.f32.mrf.mxu0
  %v192 = vadd.f32 0.0, %v191
  %193 = vdwg.mxu0
  %v194 = vadd.f32 %v151, %v189
  %v195 = vadd.f32 %v154, %v192
  %s196 = scalar_lea.vmem %s7, 48
  %v197 = vld [vmem:[%s196] sm:$0xff]
  %v198 = vld [vmem:[%s196 + $0x8] sm:$0xff]
  %v199 = vld [vmem:[%s196 + $0x10] sm:$0xff]
  %v200 = vld [vmem:[%s196 + $0x18] sm:$0xff]
  %v201 = vld [vmem:[%s196 + $0x20] sm:$0xff]
  %v202 = vld [vmem:[%s196 + $0x28] sm:$0xff]
  %s203 = scalar_lea.vmem %s7, 144
  %v204 = vld [vmem:[%s203] sm:$0xff]
  %v205 = vld [vmem:[%s203 + $0x8] sm:$0xff]
  %v206 = vld [vmem:[%s203 + $0x10] sm:$0xff]
  %v207 = vld [vmem:[%s203 + $0x18] sm:$0xff]
  %v208 = vld [vmem:[%s203 + $0x20] sm:$0xff]
  %v209 = vld [vmem:[%s203 + $0x28] sm:$0xff]
  %210 = vmatpush.msra.mxu0 0.0
  %211 = vmatpush.msra.mxu0 0.0
  %212 = vmatpush.msra.mxu0 0.0
  %213 = vmatpush.msra.mxu0 0.0
  %214 = vmatpush.msra.mxu0 0.0
  %215 = vmatpush.msra.mxu0 0.0
  %216 = vmatpush.msra.mxu0 0.0
  %217 = vmatpush.msra.mxu0 0.0
  %218 = vmatpush.msra.mxu0 0.0
  %219 = vmatpush.msra.mxu0 0.0
  %220 = vmatpush.msra.mxu0 %v209
  %221 = vmatpush.msra.mxu0 %v208
  %222 = vmatpush.msra.mxu0 %v207
  %223 = vmatpush.msra.mxu0 %v206
  %224 = vmatpush.msra.mxu0 %v205
  %225 = vmatpush.msra.mxu0 %v204
  %226 = vmatmul.f32.gmra.mxu0 %v99
  %v227 = vpop.f32.mrf.mxu0
  %v228 = vadd.f32 0.0, %v227
  %229 = vmatmul.f32.gmra.mxu0 %v102
  %v230 = vpop.f32.mrf.mxu0
  %v231 = vadd.f32 0.0, %v230
  %232 = vdwg.mxu0
  %233 = vmatpush.msra.mxu0 0.0
  %234 = vmatpush.msra.mxu0 0.0
  %235 = vmatpush.msra.mxu0 0.0
  %236 = vmatpush.msra.mxu0 0.0
  %237 = vmatpush.msra.mxu0 0.0
  %238 = vmatpush.msra.mxu0 0.0
  %239 = vmatpush.msra.mxu0 0.0
  %240 = vmatpush.msra.mxu0 0.0
  %241 = vmatpush.msra.mxu0 0.0
  %242 = vmatpush.msra.mxu0 0.0
  %243 = vmatpush.msra.mxu0 %v202
  %244 = vmatpush.msra.mxu0 %v201
  %245 = vmatpush.msra.mxu0 %v200
  %246 = vmatpush.msra.mxu0 %v199
  %247 = vmatpush.msra.mxu0 %v198
  %248 = vmatpush.msra.mxu0 %v197
  %249 = vmatmul.f32.gmra.mxu0 %v128
  %v250 = vpop.f32.mrf.mxu0
  %v251 = vadd.f32 %v228, %v250
  %252 = vmatmul.f32.gmra.mxu0 %v131
  %v253 = vpop.f32.mrf.mxu0
  %v254 = vadd.f32 %v231, %v253
  %255 = vdwg.mxu0
  %s256 = scalar_lea.vmem %s7, 240
  %v257 = vld [vmem:[%s256] sm:$0xff]
  %v258 = vld [vmem:[%s256 + $0x8] sm:$0xff]
  %v259 = vld [vmem:[%s256 + $0x10] sm:$0xff]
  %v260 = vld [vmem:[%s256 + $0x18] sm:$0xff]
  %v261 = vld [vmem:[%s256 + $0x20] sm:$0xff]
  %v262 = vld [vmem:[%s256 + $0x28] sm:$0xff]
  %263 = vmatpush.msra.mxu0 0.0
  %264 = vmatpush.msra.mxu0 0.0
  %265 = vmatpush.msra.mxu0 0.0
  %266 = vmatpush.msra.mxu0 0.0
  %267 = vmatpush.msra.mxu0 0.0
  %268 = vmatpush.msra.mxu0 0.0
  %269 = vmatpush.msra.mxu0 0.0
  %270 = vmatpush.msra.mxu0 0.0
  %271 = vmatpush.msra.mxu0 0.0
  %272 = vmatpush.msra.mxu0 0.0
  %273 = vmatpush.msra.mxu0 %v262
  %274 = vmatpush.msra.mxu0 %v261
  %275 = vmatpush.msra.mxu0 %v260
  %276 = vmatpush.msra.mxu0 %v259
  %277 = vmatpush.msra.mxu0 %v258
  %278 = vmatpush.msra.mxu0 %v257
  %279 = vmatmul.f32.gmra.mxu0 %v166
  %v280 = vpop.f32.mrf.mxu0
  %v281 = vadd.f32 0.0, %v280
  %282 = vmatmul.f32.gmra.mxu0 %v169
  %v283 = vpop.f32.mrf.mxu0
  %v284 = vadd.f32 0.0, %v283
  %285 = vdwg.mxu0
  %v286 = vadd.f32 %v251, %v281
  %v287 = vadd.f32 %v254, %v284
  %v288 = vmax.f32 %v194, %v286
  %v289 = vmax.f32 %v195, %v287
  %290 = vmatpush.msra.mxu0 0.0
  %291 = vmatpush.msra.mxu0 0.0
  %292 = vmatpush.msra.mxu0 0.0
  %293 = vmatpush.msra.mxu0 0.0
  %294 = vmatpush.msra.mxu0 0.0
  %295 = vmatpush.msra.mxu0 0.0
  %296 = vmatpush.msra.mxu0 0.0
  %297 = vmatpush.msra.mxu0 0.0
  %298 = vmatpush.msra.mxu0 0.0
  %299 = vmatpush.msra.mxu0 0.0
  %300 = vmatpush.msra.mxu0 %v96
  %301 = vmatpush.msra.mxu0 %v95
  %302 = vmatpush.msra.mxu0 %v94
  %303 = vmatpush.msra.mxu0 %v93
  %304 = vmatpush.msra.mxu0 %v92
  %305 = vmatpush.msra.mxu0 %v91
  %306 = vmatmul.f32.gmra.mxu0 %v166
  %v307 = vpop.f32.mrf.mxu0
  %v308 = vadd.f32 0.0, %v307
  %309 = vmatmul.f32.gmra.mxu0 %v169
  %v310 = vpop.f32.mrf.mxu0
  %v311 = vadd.f32 0.0, %v310
  %312 = vdwg.mxu0
  %313 = vmatpush.msra.mxu0 0.0
  %314 = vmatpush.msra.mxu0 0.0
  %315 = vmatpush.msra.mxu0 0.0
  %316 = vmatpush.msra.mxu0 0.0
  %317 = vmatpush.msra.mxu0 0.0
  %318 = vmatpush.msra.mxu0 0.0
  %319 = vmatpush.msra.mxu0 0.0
  %320 = vmatpush.msra.mxu0 0.0
  %321 = vmatpush.msra.mxu0 0.0
  %322 = vmatpush.msra.mxu0 0.0
  %323 = vmatpush.msra.mxu0 %v87
  %324 = vmatpush.msra.mxu0 %v86
  %325 = vmatpush.msra.mxu0 %v85
  %326 = vmatpush.msra.mxu0 %v84
  %327 = vmatpush.msra.mxu0 %v83
  %328 = vmatpush.msra.mxu0 %v82
  %329 = vmatmul.f32.gmra.mxu0 %v99
  %v330 = vpop.f32.mrf.mxu0
  %v331 = vadd.f32 %v308, %v330
  %332 = vmatmul.f32.gmra.mxu0 %v102
  %v333 = vpop.f32.mrf.mxu0
  %v334 = vadd.f32 %v311, %v333
  %335 = vdwg.mxu0
  %v336 = vld [vmem:[%s1 + $0x2] sm:$0xff]
  %v337 = vld [vmem:[%s1 + $0xa] sm:$0x3f]
  %v339 = vsel %vm97, %v336, 0
  %v342 = vsel %vm97, %v337, 0
  %344 = vmatpush.msra.mxu0 0.0
  %345 = vmatpush.msra.mxu0 0.0
  %346 = vmatpush.msra.mxu0 0.0
  %347 = vmatpush.msra.mxu0 0.0
  %348 = vmatpush.msra.mxu0 0.0
  %349 = vmatpush.msra.mxu0 0.0
  %350 = vmatpush.msra.mxu0 0.0
  %351 = vmatpush.msra.mxu0 0.0
  %352 = vmatpush.msra.mxu0 0.0
  %353 = vmatpush.msra.mxu0 0.0
  %354 = vmatpush.msra.mxu0 %v164
  %355 = vmatpush.msra.mxu0 %v163
  %356 = vmatpush.msra.mxu0 %v162
  %357 = vmatpush.msra.mxu0 %v161
  %358 = vmatpush.msra.mxu0 %v160
  %359 = vmatpush.msra.mxu0 %v159
  %360 = vmatmul.f32.gmra.mxu0 %v339
  %v361 = vpop.f32.mrf.mxu0
  %v362 = vadd.f32 0.0, %v361
  %363 = vmatmul.f32.gmra.mxu0 %v342
  %v364 = vpop.f32.mrf.mxu0
  %v365 = vadd.f32 0.0, %v364
  %366 = vdwg.mxu0
  %v367 = vadd.f32 %v331, %v362
  %v368 = vadd.f32 %v334, %v365
  %v369 = vmax.f32 %v288, %v367
  %v370 = vmax.f32 %v289, %v368
  %371 = vmatpush.msra.mxu0 0.0
  %372 = vmatpush.msra.mxu0 0.0
  %373 = vmatpush.msra.mxu0 0.0
  %374 = vmatpush.msra.mxu0 0.0
  %375 = vmatpush.msra.mxu0 0.0
  %376 = vmatpush.msra.mxu0 0.0
  %377 = vmatpush.msra.mxu0 0.0
  %378 = vmatpush.msra.mxu0 0.0
  %379 = vmatpush.msra.mxu0 0.0
  %380 = vmatpush.msra.mxu0 0.0
  %381 = vmatpush.msra.mxu0 %v209
  %382 = vmatpush.msra.mxu0 %v208
  %383 = vmatpush.msra.mxu0 %v207
  %384 = vmatpush.msra.mxu0 %v206
  %385 = vmatpush.msra.mxu0 %v205
  %386 = vmatpush.msra.mxu0 %v204
  %387 = vmatmul.f32.gmra.mxu0 %v166
  %v388 = vpop.f32.mrf.mxu0
  %v389 = vadd.f32 0.0, %v388
  %390 = vmatmul.f32.gmra.mxu0 %v169
  %v391 = vpop.f32.mrf.mxu0
  %v392 = vadd.f32 0.0, %v391
  %393 = vdwg.mxu0
  %394 = vmatpush.msra.mxu0 0.0
  %395 = vmatpush.msra.mxu0 0.0
  %396 = vmatpush.msra.mxu0 0.0
  %397 = vmatpush.msra.mxu0 0.0
  %398 = vmatpush.msra.mxu0 0.0
  %399 = vmatpush.msra.mxu0 0.0
  %400 = vmatpush.msra.mxu0 0.0
  %401 = vmatpush.msra.mxu0 0.0
  %402 = vmatpush.msra.mxu0 0.0
  %403 = vmatpush.msra.mxu0 0.0
  %404 = vmatpush.msra.mxu0 %v202
  %405 = vmatpush.msra.mxu0 %v201
  %406 = vmatpush.msra.mxu0 %v200
  %407 = vmatpush.msra.mxu0 %v199
  %408 = vmatpush.msra.mxu0 %v198
  %409 = vmatpush.msra.mxu0 %v197
  %410 = vmatmul.f32.gmra.mxu0 %v99
  %v411 = vpop.f32.mrf.mxu0
  %v412 = vadd.f32 %v389, %v411
  %413 = vmatmul.f32.gmra.mxu0 %v102
  %v414 = vpop.f32.mrf.mxu0
  %v415 = vadd.f32 %v392, %v414
  %416 = vdwg.mxu0
  %417 = vmatpush.msra.mxu0 0.0
  %418 = vmatpush.msra.mxu0 0.0
  %419 = vmatpush.msra.mxu0 0.0
  %420 = vmatpush.msra.mxu0 0.0
  %421 = vmatpush.msra.mxu0 0.0
  %422 = vmatpush.msra.mxu0 0.0
  %423 = vmatpush.msra.mxu0 0.0
  %424 = vmatpush.msra.mxu0 0.0
  %425 = vmatpush.msra.mxu0 0.0
  %426 = vmatpush.msra.mxu0 0.0
  %427 = vmatpush.msra.mxu0 %v262
  %428 = vmatpush.msra.mxu0 %v261
  %429 = vmatpush.msra.mxu0 %v260
  %430 = vmatpush.msra.mxu0 %v259
  %431 = vmatpush.msra.mxu0 %v258
  %432 = vmatpush.msra.mxu0 %v257
  %433 = vmatmul.f32.gmra.mxu0 %v339
  %v434 = vpop.f32.mrf.mxu0
  %v435 = vadd.f32 0.0, %v434
  %436 = vmatmul.f32.gmra.mxu0 %v342
  %v437 = vpop.f32.mrf.mxu0
  %v438 = vadd.f32 0.0, %v437
  %439 = vdwg.mxu0
  %v440 = vadd.f32 %v412, %v435
  %v441 = vadd.f32 %v415, %v438
  %v442 = vmax.f32 %v369, %v440
  %v443 = vmax.f32 %v370, %v441
  %v444 = vld [vmem:[%s8] sm:$0x1]
  %v446 = vperm.slane %v444, 0
  %v448 = vadd.f32 %v442, %v446
  %v449 = vadd.f32 %v443, %v446
  %v450 = vmax.f32 %v448, 0.0
  %v451 = vmax.f32 %v449, 0.0
  %vm452 = vcmask 916480
  %453 = vst.msk [vmem:[#allocation2] sm:$0xff] %vm452, %v450
  %vm454 = vcmask 914432
  %455 = vst.msk [vmem:[#allocation2 + $0x8] sm:$0x3f] %vm454, %v451
  %v456 = vld [vmem:[#allocation2] sm:$0xff]
  %v457 = vld [vmem:[#allocation2 + $0x8] sm:$0x3]
  %v458 = vld [vmem:[%s9] sm:$0xff]
  %v459 = vld [vmem:[%s9 + $0x8] sm:$0xff]
  %v460 = vld [vmem:[%s9 + $0x10] sm:$0xff]
  %v461 = vld [vmem:[%s9 + $0x18] sm:$0xff]
  %v462 = vld [vmem:[%s9 + $0x20] sm:$0xff]
  %v463 = vld [vmem:[%s9 + $0x28] sm:$0xff]
  %v464 = vld [vmem:[%s9 + $0x30] sm:$0xff]
  %v465 = vld [vmem:[%s9 + $0x38] sm:$0xff]
  %v466 = vld [vmem:[%s9 + $0x40] sm:$0xff]
  %v467 = vld [vmem:[%s9 + $0x48] sm:$0xff]
  %v468 = vld [vmem:[%s9 + $0x50] sm:$0xff]
  %v469 = vld [vmem:[%s9 + $0x58] sm:$0xff]
  %v470 = vld [vmem:[%s9 + $0x60] sm:$0xff]
  %v471 = vld [vmem:[%s9 + $0x68] sm:$0xff]
  %v472 = vld [vmem:[%s9 + $0x70] sm:$0xff]
  %v473 = vld [vmem:[%s9 + $0x78] sm:$0xff]
  %v474 = vld [vmem:[%s9 + $0x80] sm:$0xff]
  %v475 = vld [vmem:[%s9 + $0x88] sm:$0xff]
  %v476 = vld [vmem:[%s9 + $0x90] sm:$0xff]
  %v477 = vld [vmem:[%s9 + $0x98] sm:$0xff]
  %v478 = vld [vmem:[%s9 + $0xa0] sm:$0xff]
  %v479 = vld [vmem:[%s9 + $0xa8] sm:$0xff]
  %v480 = vld [vmem:[%s9 + $0xb0] sm:$0xff]
  %v481 = vld [vmem:[%s9 + $0xb8] sm:$0xff]
  %v482 = vld [vmem:[%s9 + $0xc0] sm:$0xff]
  %v483 = vld [vmem:[%s9 + $0xc8] sm:$0xff]
  %v484 = vld [vmem:[%s9 + $0xd0] sm:$0xff]
  %v485 = vld [vmem:[%s9 + $0xd8] sm:$0xff]
  %v486 = vld [vmem:[#allocation2 + $0x2] sm:$0xff]
  %v487 = vld [vmem:[#allocation2 + $0xa] sm:$0x3]
  %s488 = scalar_lea.vmem %s9, 224
  %v489 = vld [vmem:[%s488] sm:$0xff]
  %v490 = vld [vmem:[%s488 + $0x8] sm:$0xff]
  %v491 = vld [vmem:[%s488 + $0x10] sm:$0xff]
  %v492 = vld [vmem:[%s488 + $0x18] sm:$0xff]
  %v493 = vld [vmem:[%s488 + $0x20] sm:$0xff]
  %v494 = vld [vmem:[%s488 + $0x28] sm:$0xff]
  %v495 = vld [vmem:[%s488 + $0x30] sm:$0xff]
  %v496 = vld [vmem:[%s488 + $0x38] sm:$0xff]
  %v497 = vld [vmem:[%s488 + $0x40] sm:$0xff]
  %v498 = vld [vmem:[%s488 + $0x48] sm:$0xff]
  %v499 = vld [vmem:[%s488 + $0x50] sm:$0xff]
  %v500 = vld [vmem:[%s488 + $0x58] sm:$0xff]
  %v501 = vld [vmem:[%s488 + $0x60] sm:$0xff]
  %v502 = vld [vmem:[%s488 + $0x68] sm:$0xff]
  %v503 = vld [vmem:[%s488 + $0x70] sm:$0xff]
  %v504 = vld [vmem:[%s488 + $0x78] sm:$0xff]
  %v505 = vld [vmem:[%s488 + $0x80] sm:$0xff]
  %v506 = vld [vmem:[%s488 + $0x88] sm:$0xff]
  %v507 = vld [vmem:[%s488 + $0x90] sm:$0xff]
  %v508 = vld [vmem:[%s488 + $0x98] sm:$0xff]
  %v509 = vld [vmem:[%s488 + $0xa0] sm:$0xff]
  %v510 = vld [vmem:[%s488 + $0xa8] sm:$0xff]
  %v511 = vld [vmem:[%s488 + $0xb0] sm:$0xff]
  %v512 = vld [vmem:[%s488 + $0xb8] sm:$0xff]
  %v513 = vld [vmem:[%s488 + $0xc0] sm:$0xff]
  %v514 = vld [vmem:[%s488 + $0xc8] sm:$0xff]
  %v515 = vld [vmem:[%s488 + $0xd0] sm:$0xff]
  %v516 = vld [vmem:[%s488 + $0xd8] sm:$0xff]
  %v518 = vsel %vm452, %v486, 0
  %v521 = vsel %vm452, %v487, 0
  %523 = vmatpush.msra.mxu0 0.0
  %524 = vmatpush.msra.mxu0 0.0
  %525 = vmatpush.msra.mxu0 %v515
  %526 = vmatpush.msra.mxu0 %v513
  %527 = vmatpush.msra.mxu0 %v511
  %528 = vmatpush.msra.mxu0 %v509
  %529 = vmatpush.msra.mxu0 %v507
  %530 = vmatpush.msra.mxu0 %v505
  %531 = vmatpush.msra.mxu0 %v503
  %532 = vmatpush.msra.mxu0 %v501
  %533 = vmatpush.msra.mxu0 %v499
  %534 = vmatpush.msra.mxu0 %v497
  %535 = vmatpush.msra.mxu0 %v495
  %536 = vmatpush.msra.mxu0 %v493
  %537 = vmatpush.msra.mxu0 %v491
  %538 = vmatpush.msra.mxu0 %v489
  %539 = vmatmul.f32.gmra.mxu0 %v518
  %v540 = vpop.f32.mrf.mxu0
  %v541 = vadd.f32 0.0, %v540
  %542 = vmatmul.f32.gmra.mxu0 %v521
  %v543 = vpop.f32.mrf.mxu0
  %v544 = vadd.f32 0.0, %v543
  %545 = vdwg.mxu0
  %546 = vmatpush.msra.mxu0 0.0
  %547 = vmatpush.msra.mxu0 0.0
  %548 = vmatpush.msra.mxu0 %v516
  %549 = vmatpush.msra.mxu0 %v514
  %550 = vmatpush.msra.mxu0 %v512
  %551 = vmatpush.msra.mxu0 %v510
  %552 = vmatpush.msra.mxu0 %v508
  %553 = vmatpush.msra.mxu0 %v506
  %554 = vmatpush.msra.mxu0 %v504
  %555 = vmatpush.msra.mxu0 %v502
  %556 = vmatpush.msra.mxu0 %v500
  %557 = vmatpush.msra.mxu0 %v498
  %558 = vmatpush.msra.mxu0 %v496
  %559 = vmatpush.msra.mxu0 %v494
  %560 = vmatpush.msra.mxu0 %v492
  %561 = vmatpush.msra.mxu0 %v490
  %562 = vmatmul.f32.gmra.mxu0 %v518
  %v563 = vpop.f32.mrf.mxu0
  %v564 = vadd.f32 0.0, %v563
  %565 = vmatmul.f32.gmra.mxu0 %v521
  %v566 = vpop.f32.mrf.mxu0
  %v567 = vadd.f32 0.0, %v566
  %568 = vdwg.mxu0
  %v570 = vsel %vm452, %v456, 0
  %v573 = vsel %vm452, %v457, 0
  %575 = vmatpush.msra.mxu0 0.0
  %576 = vmatpush.msra.mxu0 0.0
  %577 = vmatpush.msra.mxu0 %v484
  %578 = vmatpush.msra.mxu0 %v482
  %579 = vmatpush.msra.mxu0 %v480
  %580 = vmatpush.msra.mxu0 %v478
  %581 = vmatpush.msra.mxu0 %v476
  %582 = vmatpush.msra.mxu0 %v474
  %583 = vmatpush.msra.mxu0 %v472
  %584 = vmatpush.msra.mxu0 %v470
  %585 = vmatpush.msra.mxu0 %v468
  %586 = vmatpush.msra.mxu0 %v466
  %587 = vmatpush.msra.mxu0 %v464
  %588 = vmatpush.msra.mxu0 %v462
  %589 = vmatpush.msra.mxu0 %v460
  %590 = vmatpush.msra.mxu0 %v458
  %591 = vmatmul.f32.gmra.mxu0 %v570
  %v592 = vpop.f32.mrf.mxu0
  %v593 = vadd.f32 %v541, %v592
  %594 = vmatmul.f32.gmra.mxu0 %v573
  %v595 = vpop.f32.mrf.mxu0
  %v596 = vadd.f32 %v544, %v595
  %597 = vdwg.mxu0
  %598 = vmatpush.msra.mxu0 0.0
  %599 = vmatpush.msra.mxu0 0.0
  %600 = vmatpush.msra.mxu0 %v485
  %601 = vmatpush.msra.mxu0 %v483
  %602 = vmatpush.msra.mxu0 %v481
  %603 = vmatpush.msra.mxu0 %v479
  %604 = vmatpush.msra.mxu0 %v477
  %605 = vmatpush.msra.mxu0 %v475
  %606 = vmatpush.msra.mxu0 %v473
  %607 = vmatpush.msra.mxu0 %v471
  %608 = vmatpush.msra.mxu0 %v469
  %609 = vmatpush.msra.mxu0 %v467
  %610 = vmatpush.msra.mxu0 %v465
  %611 = vmatpush.msra.mxu0 %v463
  %612 = vmatpush.msra.mxu0 %v461
  %613 = vmatpush.msra.mxu0 %v459
  %614 = vmatmul.f32.gmra.mxu0 %v570
  %v615 = vpop.f32.mrf.mxu0
  %v616 = vadd.f32 %v564, %v615
  %617 = vmatmul.f32.gmra.mxu0 %v573
  %v618 = vpop.f32.mrf.mxu0
  %v619 = vadd.f32 %v567, %v618
  %620 = vdwg.mxu0
  %v621 = vld [vmem:[#allocation2 + $0x4] sm:$0xff]
  %v622 = vld [vmem:[#allocation2 + $0xc] sm:$0x3]
  %s623 = scalar_lea.vmem %s9, 448
  %v624 = vld [vmem:[%s623] sm:$0xff]
  %v625 = vld [vmem:[%s623 + $0x8] sm:$0xff]
  %v626 = vld [vmem:[%s623 + $0x10] sm:$0xff]
  %v627 = vld [vmem:[%s623 + $0x18] sm:$0xff]
  %v628 = vld [vmem:[%s623 + $0x20] sm:$0xff]
  %v629 = vld [vmem:[%s623 + $0x28] sm:$0xff]
  %v630 = vld [vmem:[%s623 + $0x30] sm:$0xff]
  %v631 = vld [vmem:[%s623 + $0x38] sm:$0xff]
  %v632 = vld [vmem:[%s623 + $0x40] sm:$0xff]
  %v633 = vld [vmem:[%s623 + $0x48] sm:$0xff]
  %v634 = vld [vmem:[%s623 + $0x50] sm:$0xff]
  %v635 = vld [vmem:[%s623 + $0x58] sm:$0xff]
  %v636 = vld [vmem:[%s623 + $0x60] sm:$0xff]
  %v637 = vld [vmem:[%s623 + $0x68] sm:$0xff]
  %v638 = vld [vmem:[%s623 + $0x70] sm:$0xff]
  %v639 = vld [vmem:[%s623 + $0x78] sm:$0xff]
  %v640 = vld [vmem:[%s623 + $0x80] sm:$0xff]
  %v641 = vld [vmem:[%s623 + $0x88] sm:$0xff]
  %v642 = vld [vmem:[%s623 + $0x90] sm:$0xff]
  %v643 = vld [vmem:[%s623 + $0x98] sm:$0xff]
  %v644 = vld [vmem:[%s623 + $0xa0] sm:$0xff]
  %v645 = vld [vmem:[%s623 + $0xa8] sm:$0xff]
  %v646 = vld [vmem:[%s623 + $0xb0] sm:$0xff]
  %v647 = vld [vmem:[%s623 + $0xb8] sm:$0xff]
  %v648 = vld [vmem:[%s623 + $0xc0] sm:$0xff]
  %v649 = vld [vmem:[%s623 + $0xc8] sm:$0xff]
  %v650 = vld [vmem:[%s623 + $0xd0] sm:$0xff]
  %v651 = vld [vmem:[%s623 + $0xd8] sm:$0xff]
  %v653 = vsel %vm452, %v621, 0
  %v656 = vsel %vm452, %v622, 0
  %658 = vmatpush.msra.mxu0 0.0
  %659 = vmatpush.msra.mxu0 0.0
  %660 = vmatpush.msra.mxu0 %v650
  %661 = vmatpush.msra.mxu0 %v648
  %662 = vmatpush.msra.mxu0 %v646
  %663 = vmatpush.msra.mxu0 %v644
  %664 = vmatpush.msra.mxu0 %v642
  %665 = vmatpush.msra.mxu0 %v640
  %666 = vmatpush.msra.mxu0 %v638
  %667 = vmatpush.msra.mxu0 %v636
  %668 = vmatpush.msra.mxu0 %v634
  %669 = vmatpush.msra.mxu0 %v632
  %670 = vmatpush.msra.mxu0 %v630
  %671 = vmatpush.msra.mxu0 %v628
  %672 = vmatpush.msra.mxu0 %v626
  %673 = vmatpush.msra.mxu0 %v624
  %674 = vmatmul.f32.gmra.mxu0 %v653
  %v675 = vpop.f32.mrf.mxu0
  %v676 = vadd.f32 0.0, %v675
  %677 = vmatmul.f32.gmra.mxu0 %v656
  %v678 = vpop.f32.mrf.mxu0
  %v679 = vadd.f32 0.0, %v678
  %680 = vdwg.mxu0
  %681 = vmatpush.msra.mxu0 0.0
  %682 = vmatpush.msra.mxu0 0.0
  %683 = vmatpush.msra.mxu0 %v651
  %684 = vmatpush.msra.mxu0 %v649
  %685 = vmatpush.msra.mxu0 %v647
  %686 = vmatpush.msra.mxu0 %v645
  %687 = vmatpush.msra.mxu0 %v643
  %688 = vmatpush.msra.mxu0 %v641
  %689 = vmatpush.msra.mxu0 %v639
  %690 = vmatpush.msra.mxu0 %v637
  %691 = vmatpush.msra.mxu0 %v635
  %692 = vmatpush.msra.mxu0 %v633
  %693 = vmatpush.msra.mxu0 %v631
  %694 = vmatpush.msra.mxu0 %v629
  %695 = vmatpush.msra.mxu0 %v627
  %696 = vmatpush.msra.mxu0 %v625
  %697 = vmatmul.f32.gmra.mxu0 %v653
  %v698 = vpop.f32.mrf.mxu0
  %v699 = vadd.f32 0.0, %v698
  %700 = vmatmul.f32.gmra.mxu0 %v656
  %v701 = vpop.f32.mrf.mxu0
  %v702 = vadd.f32 0.0, %v701
  %703 = vdwg.mxu0
  %v704 = vadd.f32 %v593, %v676
  %v705 = vadd.f32 %v616, %v699
  %v706 = vadd.f32 %v596, %v679
  %v707 = vadd.f32 %v619, %v702
  %v708 = vld [vmem:[%s10] sm:$0x3]
  %v710 = vperm.slane %v708, 0
  %v711 = vperm.slane %v708, 1
  %v714 = vadd.f32 %v704, %v710
  %v715 = vadd.f32 %v705, %v711
  %v716 = vadd.f32 %v706, %v710
  %v717 = vadd.f32 %v707, %v711
  %v718 = vmax.f32 %v714, 0.0
  %v719 = vmax.f32 %v715, 0.0
  %v720 = vmax.f32 %v716, 0.0
  %v721 = vmax.f32 %v717, 0.0
  %722 = vst [vmem:[#allocation3] sm:$0xff] %v718
  %vm723 = vcmask 261120
  %724 = vst.msk [vmem:[#allocation3 + $0x8] sm:$0xff] %vm723, %v719
  %725 = vst [vmem:[#allocation3 + $0x10] sm:$0x3] %v720
  %vm726 = vcmask 254976
  %727 = vst.msk [vmem:[#allocation3 + $0x18] sm:$0x3] %vm726, %v721
  %v728 = vld [vmem:[#allocation3] sm:$0x3]
  %v729 = vld [vmem:[#allocation3 + $0x8] sm:$0x3]
  %v730 = vld [vmem:[%s11] sm:$0xff]
  %v731 = vld [vmem:[%s11 + $0x8] sm:$0xff]
  %v732 = vld [vmem:[%s11 + $0x10] sm:$0xff]
  %v733 = vld [vmem:[%s11 + $0x18] sm:$0xff]
  %v734 = vld [vmem:[%s11 + $0x20] sm:$0xff]
  %v735 = vld [vmem:[%s11 + $0x28] sm:$0xff]
  %v736 = vld [vmem:[%s11 + $0x30] sm:$0xff]
  %v737 = vld [vmem:[%s11 + $0x38] sm:$0xff]
  %v738 = vld [vmem:[%s11 + $0x40] sm:$0xff]
  %v739 = vld [vmem:[%s11 + $0x48] sm:$0xff]
  %v740 = vld [vmem:[%s11 + $0x50] sm:$0xff]
  %v741 = vld [vmem:[%s11 + $0x58] sm:$0xff]
  %v742 = vld [vmem:[%s11 + $0x60] sm:$0xff]
  %v743 = vld [vmem:[%s11 + $0x68] sm:$0xff]
  %v744 = vld [vmem:[%s11 + $0x70] sm:$0xff]
  %v745 = vld [vmem:[%s11 + $0x78] sm:$0xff]
  %v746 = vld [vmem:[%s11 + $0x80] sm:$0xff]
  %v747 = vld [vmem:[%s11 + $0x88] sm:$0xff]
  %v748 = vld [vmem:[%s11 + $0x90] sm:$0xff]
  %v749 = vld [vmem:[%s11 + $0x98] sm:$0xff]
  %v750 = vld [vmem:[#allocation3] sm:$0xc]
  %v751 = vld [vmem:[#allocation3 + $0x8] sm:$0xc]
  %s752 = scalar_lea.vmem %s11, 160
  %v753 = vld [vmem:[%s752] sm:$0xff]
  %v754 = vld [vmem:[%s752 + $0x8] sm:$0xff]
  %v755 = vld [vmem:[%s752 + $0x10] sm:$0xff]
  %v756 = vld [vmem:[%s752 + $0x18] sm:$0xff]
  %v757 = vld [vmem:[%s752 + $0x20] sm:$0xff]
  %v758 = vld [vmem:[%s752 + $0x28] sm:$0xff]
  %v759 = vld [vmem:[%s752 + $0x30] sm:$0xff]
  %v760 = vld [vmem:[%s752 + $0x38] sm:$0xff]
  %v761 = vld [vmem:[%s752 + $0x40] sm:$0xff]
  %v762 = vld [vmem:[%s752 + $0x48] sm:$0xff]
  %v763 = vld [vmem:[%s752 + $0x50] sm:$0xff]
  %v764 = vld [vmem:[%s752 + $0x58] sm:$0xff]
  %v765 = vld [vmem:[%s752 + $0x60] sm:$0xff]
  %v766 = vld [vmem:[%s752 + $0x68] sm:$0xff]
  %v767 = vld [vmem:[%s752 + $0x70] sm:$0xff]
  %v768 = vld [vmem:[%s752 + $0x78] sm:$0xff]
  %v769 = vld [vmem:[%s752 + $0x80] sm:$0xff]
  %v770 = vld [vmem:[%s752 + $0x88] sm:$0xff]
  %v771 = vld [vmem:[%s752 + $0x90] sm:$0xff]
  %v772 = vld [vmem:[%s752 + $0x98] sm:$0xff]
  %v775 = vrot.slane %v750, 2
  %v776 = vrot.slane %v751, 2
  %v778 = vsel %vm723, %v776, 0
  %780 = vmatpush.msra.mxu0 %v768
  %781 = vmatpush.msra.mxu0 %v767
  %782 = vmatpush.msra.mxu0 %v766
  %783 = vmatpush.msra.mxu0 %v765
  %784 = vmatpush.msra.mxu0 %v764
  %785 = vmatpush.msra.mxu0 %v763
  %786 = vmatpush.msra.mxu0 %v762
  %787 = vmatpush.msra.mxu0 %v761
  %788 = vmatpush.msra.mxu0 %v760
  %789 = vmatpush.msra.mxu0 %v759
  %790 = vmatpush.msra.mxu0 %v758
  %791 = vmatpush.msra.mxu0 %v757
  %792 = vmatpush.msra.mxu0 %v756
  %793 = vmatpush.msra.mxu0 %v755
  %794 = vmatpush.msra.mxu0 %v754
  %795 = vmatpush.msra.mxu0 %v753
  %796 = vmatmul.f32.gmra.mxu0 %v775
  %v797 = vpop.f32.mrf.mxu0
  %v798 = vadd.f32 0.0, %v797
  %799 = vdwg.mxu0
  %800 = vmatpush.msra.mxu0 0.0
  %801 = vmatpush.msra.mxu0 0.0
  %802 = vmatpush.msra.mxu0 0.0
  %803 = vmatpush.msra.mxu0 0.0
  %804 = vmatpush.msra.mxu0 0.0
  %805 = vmatpush.msra.mxu0 0.0
  %806 = vmatpush.msra.mxu0 0.0
  %807 = vmatpush.msra.mxu0 0.0
  %808 = vmatpush.msra.mxu0 0.0
  %809 = vmatpush.msra.mxu0 0.0
  %810 = vmatpush.msra.mxu0 0.0
  %811 = vmatpush.msra.mxu0 0.0
  %812 = vmatpush.msra.mxu0 %v772
  %813 = vmatpush.msra.mxu0 %v771
  %814 = vmatpush.msra.mxu0 %v770
  %815 = vmatpush.msra.mxu0 %v769
  %816 = vmatmul.f32.gmra.mxu0 %v778
  %v817 = vpop.f32.mrf.mxu0
  %v818 = vadd.f32 %v798, %v817
  %819 = vdwg.mxu0
  %v821 = vsel %vm723, %v729, 0
  %823 = vmatpush.msra.mxu0 %v745
  %824 = vmatpush.msra.mxu0 %v744
  %825 = vmatpush.msra.mxu0 %v743
  %826 = vmatpush.msra.mxu0 %v742
  %827 = vmatpush.msra.mxu0 %v741
  %828 = vmatpush.msra.mxu0 %v740
  %829 = vmatpush.msra.mxu0 %v739
  %830 = vmatpush.msra.mxu0 %v738
  %831 = vmatpush.msra.mxu0 %v737
  %832 = vmatpush.msra.mxu0 %v736
  %833 = vmatpush.msra.mxu0 %v735
  %834 = vmatpush.msra.mxu0 %v734
  %835 = vmatpush.msra.mxu0 %v733
  %836 = vmatpush.msra.mxu0 %v732
  %837 = vmatpush.msra.mxu0 %v731
  %838 = vmatpush.msra.mxu0 %v730
  %839 = vmatmul.f32.gmra.mxu0 %v728
  %v840 = vpop.f32.mrf.mxu0
  %v841 = vadd.f32 %v818, %v840
  %842 = vdwg.mxu0
  %843 = vmatpush.msra.mxu0 0.0
  %844 = vmatpush.msra.mxu0 0.0
  %845 = vmatpush.msra.mxu0 0.0
  %846 = vmatpush.msra.mxu0 0.0
  %847 = vmatpush.msra.mxu0 0.0
  %848 = vmatpush.msra.mxu0 0.0
  %849 = vmatpush.msra.mxu0 0.0
  %850 = vmatpush.msra.mxu0 0.0
  %851 = vmatpush.msra.mxu0 0.0
  %852 = vmatpush.msra.mxu0 0.0
  %853 = vmatpush.msra.mxu0 0.0
  %854 = vmatpush.msra.mxu0 0.0
  %855 = vmatpush.msra.mxu0 %v749
  %856 = vmatpush.msra.mxu0 %v748
  %857 = vmatpush.msra.mxu0 %v747
  %858 = vmatpush.msra.mxu0 %v746
  %859 = vmatmul.f32.gmra.mxu0 %v821
  %v860 = vpop.f32.mrf.mxu0
  %v861 = vadd.f32 %v841, %v860
  %862 = vdwg.mxu0
  %v863 = vld [vmem:[#allocation3] sm:$0x30]
  %v864 = vld [vmem:[#allocation3 + $0x8] sm:$0x30]
  %s865 = scalar_lea.vmem %s11, 320
  %v866 = vld [vmem:[%s865] sm:$0xff]
  %v867 = vld [vmem:[%s865 + $0x8] sm:$0xff]
  %v868 = vld [vmem:[%s865 + $0x10] sm:$0xff]
  %v869 = vld [vmem:[%s865 + $0x18] sm:$0xff]
  %v870 = vld [vmem:[%s865 + $0x20] sm:$0xff]
  %v871 = vld [vmem:[%s865 + $0x28] sm:$0xff]
  %v872 = vld [vmem:[%s865 + $0x30] sm:$0xff]
  %v873 = vld [vmem:[%s865 + $0x38] sm:$0xff]
  %v874 = vld [vmem:[%s865 + $0x40] sm:$0xff]
  %v875 = vld [vmem:[%s865 + $0x48] sm:$0xff]
  %v876 = vld [vmem:[%s865 + $0x50] sm:$0xff]
  %v877 = vld [vmem:[%s865 + $0x58] sm:$0xff]
  %v878 = vld [vmem:[%s865 + $0x60] sm:$0xff]
  %v879 = vld [vmem:[%s865 + $0x68] sm:$0xff]
  %v880 = vld [vmem:[%s865 + $0x70] sm:$0xff]
  %v881 = vld [vmem:[%s865 + $0x78] sm:$0xff]
  %v882 = vld [vmem:[%s865 + $0x80] sm:$0xff]
  %v883 = vld [vmem:[%s865 + $0x88] sm:$0xff]
  %v884 = vld [vmem:[%s865 + $0x90] sm:$0xff]
  %v885 = vld [vmem:[%s865 + $0x98] sm:$0xff]
  %v888 = vrot.slane %v863, 4
  %v889 = vrot.slane %v864, 4
  %v891 = vsel %vm723, %v889, 0
  %893 = vmatpush.msra.mxu0 %v881
  %894 = vmatpush.msra.mxu0 %v880
  %895 = vmatpush.msra.mxu0 %v879
  %896 = vmatpush.msra.mxu0 %v878
  %897 = vmatpush.msra.mxu0 %v877
  %898 = vmatpush.msra.mxu0 %v876
  %899 = vmatpush.msra.mxu0 %v875
  %900 = vmatpush.msra.mxu0 %v874
  %901 = vmatpush.msra.mxu0 %v873
  %902 = vmatpush.msra.mxu0 %v872
  %903 = vmatpush.msra.mxu0 %v871
  %904 = vmatpush.msra.mxu0 %v870
  %905 = vmatpush.msra.mxu0 %v869
  %906 = vmatpush.msra.mxu0 %v868
  %907 = vmatpush.msra.mxu0 %v867
  %908 = vmatpush.msra.mxu0 %v866
  %909 = vmatmul.f32.gmra.mxu0 %v888
  %v910 = vpop.f32.mrf.mxu0
  %v911 = vadd.f32 0.0, %v910
  %912 = vdwg.mxu0
  %913 = vmatpush.msra.mxu0 0.0
  %914 = vmatpush.msra.mxu0 0.0
  %915 = vmatpush.msra.mxu0 0.0
  %916 = vmatpush.msra.mxu0 0.0
  %917 = vmatpush.msra.mxu0 0.0
  %918 = vmatpush.msra.mxu0 0.0
  %919 = vmatpush.msra.mxu0 0.0
  %920 = vmatpush.msra.mxu0 0.0
  %921 = vmatpush.msra.mxu0 0.0
  %922 = vmatpush.msra.mxu0 0.0
  %923 = vmatpush.msra.mxu0 0.0
  %924 = vmatpush.msra.mxu0 0.0
  %925 = vmatpush.msra.mxu0 %v885
  %926 = vmatpush.msra.mxu0 %v884
  %927 = vmatpush.msra.mxu0 %v883
  %928 = vmatpush.msra.mxu0 %v882
  %929 = vmatmul.f32.gmra.mxu0 %v891
  %v930 = vpop.f32.mrf.mxu0
  %v931 = vadd.f32 %v911, %v930
  %932 = vdwg.mxu0
  %v933 = vadd.f32 %v861, %v931
  %v934 = vld [vmem:[#allocation3] sm:$0xc0]
  %v935 = vld [vmem:[#allocation3 + $0x8] sm:$0xc0]
  %s936 = scalar_lea.vmem %s11, 480
  %v937 = vld [vmem:[%s936] sm:$0xff]
  %v938 = vld [vmem:[%s936 + $0x8] sm:$0xff]
  %v939 = vld [vmem:[%s936 + $0x10] sm:$0xff]
  %v940 = vld [vmem:[%s936 + $0x18] sm:$0xff]
  %v941 = vld [vmem:[%s936 + $0x20] sm:$0xff]
  %v942 = vld [vmem:[%s936 + $0x28] sm:$0xff]
  %v943 = vld [vmem:[%s936 + $0x30] sm:$0xff]
  %v944 = vld [vmem:[%s936 + $0x38] sm:$0xff]
  %v945 = vld [vmem:[%s936 + $0x40] sm:$0xff]
  %v946 = vld [vmem:[%s936 + $0x48] sm:$0xff]
  %v947 = vld [vmem:[%s936 + $0x50] sm:$0xff]
  %v948 = vld [vmem:[%s936 + $0x58] sm:$0xff]
  %v949 = vld [vmem:[%s936 + $0x60] sm:$0xff]
  %v950 = vld [vmem:[%s936 + $0x68] sm:$0xff]
  %v951 = vld [vmem:[%s936 + $0x70] sm:$0xff]
  %v952 = vld [vmem:[%s936 + $0x78] sm:$0xff]
  %v953 = vld [vmem:[%s936 + $0x80] sm:$0xff]
  %v954 = vld [vmem:[%s936 + $0x88] sm:$0xff]
  %v955 = vld [vmem:[%s936 + $0x90] sm:$0xff]
  %v956 = vld [vmem:[%s936 + $0x98] sm:$0xff]
  %v959 = vrot.slane %v934, 6
  %v960 = vrot.slane %v935, 6
  %v962 = vsel %vm723, %v960, 0
  %964 = vmatpush.msra.mxu0 %v952
  %965 = vmatpush.msra.mxu0 %v951
  %966 = vmatpush.msra.mxu0 %v950
  %967 = vmatpush.msra.mxu0 %v949
  %968 = vmatpush.msra.mxu0 %v948
  %969 = vmatpush.msra.mxu0 %v947
  %970 = vmatpush.msra.mxu0 %v946
  %971 = vmatpush.msra.mxu0 %v945
  %972 = vmatpush.msra.mxu0 %v944
  %973 = vmatpush.msra.mxu0 %v943
  %974 = vmatpush.msra.mxu0 %v942
  %975 = vmatpush.msra.mxu0 %v941
  %976 = vmatpush.msra.mxu0 %v940
  %977 = vmatpush.msra.mxu0 %v939
  %978 = vmatpush.msra.mxu0 %v938
  %979 = vmatpush.msra.mxu0 %v937
  %980 = vmatmul.f32.gmra.mxu0 %v959
  %v981 = vpop.f32.mrf.mxu0
  %v982 = vadd.f32 0.0, %v981
  %983 = vdwg.mxu0
  %984 = vmatpush.msra.mxu0 0.0
  %985 = vmatpush.msra.mxu0 0.0
  %986 = vmatpush.msra.mxu0 0.0
  %987 = vmatpush.msra.mxu0 0.0
  %988 = vmatpush.msra.mxu0 0.0
  %989 = vmatpush.msra.mxu0 0.0
  %990 = vmatpush.msra.mxu0 0.0
  %991 = vmatpush.msra.mxu0 0.0
  %992 = vmatpush.msra.mxu0 0.0
  %993 = vmatpush.msra.mxu0 0.0
  %994 = vmatpush.msra.mxu0 0.0
  %995 = vmatpush.msra.mxu0 0.0
  %996 = vmatpush.msra.mxu0 %v956
  %997 = vmatpush.msra.mxu0 %v955
  %998 = vmatpush.msra.mxu0 %v954
  %999 = vmatpush.msra.mxu0 %v953
  %1000 = vmatmul.f32.gmra.mxu0 %v962
  %v1001 = vpop.f32.mrf.mxu0
  %v1002 = vadd.f32 %v982, %v1001
  %1003 = vdwg.mxu0
  %v1004 = vadd.f32 %v933, %v1002
  %v1005 = vld [vmem:[#allocation3 + $0x10] sm:$0x3]
  %v1006 = vld [vmem:[#allocation3 + $0x18] sm:$0x3]
  %s1007 = scalar_lea.vmem %s11, 640
  %v1008 = vld [vmem:[%s1007] sm:$0xff]
  %v1009 = vld [vmem:[%s1007 + $0x8] sm:$0xff]
  %v1010 = vld [vmem:[%s1007 + $0x10] sm:$0xff]
  %v1011 = vld [vmem:[%s1007 + $0x18] sm:$0xff]
  %v1012 = vld [vmem:[%s1007 + $0x20] sm:$0xff]
  %v1013 = vld [vmem:[%s1007 + $0x28] sm:$0xff]
  %v1014 = vld [vmem:[%s1007 + $0x30] sm:$0xff]
  %v1015 = vld [vmem:[%s1007 + $0x38] sm:$0xff]
  %v1016 = vld [vmem:[%s1007 + $0x40] sm:$0xff]
  %v1017 = vld [vmem:[%s1007 + $0x48] sm:$0xff]
  %v1018 = vld [vmem:[%s1007 + $0x50] sm:$0xff]
  %v1019 = vld [vmem:[%s1007 + $0x58] sm:$0xff]
  %v1020 = vld [vmem:[%s1007 + $0x60] sm:$0xff]
  %v1021 = vld [vmem:[%s1007 + $0x68] sm:$0xff]
  %v1022 = vld [vmem:[%s1007 + $0x70] sm:$0xff]
  %v1023 = vld [vmem:[%s1007 + $0x78] sm:$0xff]
  %v1024 = vld [vmem:[%s1007 + $0x80] sm:$0xff]
  %v1025 = vld [vmem:[%s1007 + $0x88] sm:$0xff]
  %v1026 = vld [vmem:[%s1007 + $0x90] sm:$0xff]
  %v1027 = vld [vmem:[%s1007 + $0x98] sm:$0xff]
  %v1029 = vsel %vm723, %v1006, 0
  %1031 = vmatpush.msra.mxu0 %v1023
  %1032 = vmatpush.msra.mxu0 %v1022
  %1033 = vmatpush.msra.mxu0 %v1021
  %1034 = vmatpush.msra.mxu0 %v1020
  %1035 = vmatpush.msra.mxu0 %v1019
  %1036 = vmatpush.msra.mxu0 %v1018
  %1037 = vmatpush.msra.mxu0 %v1017
  %1038 = vmatpush.msra.mxu0 %v1016
  %1039 = vmatpush.msra.mxu0 %v1015
  %1040 = vmatpush.msra.mxu0 %v1014
  %1041 = vmatpush.msra.mxu0 %v1013
  %1042 = vmatpush.msra.mxu0 %v1012
  %1043 = vmatpush.msra.mxu0 %v1011
  %1044 = vmatpush.msra.mxu0 %v1010
  %1045 = vmatpush.msra.mxu0 %v1009
  %1046 = vmatpush.msra.mxu0 %v1008
  %1047 = vmatmul.f32.gmra.mxu0 %v1005
  %v1048 = vpop.f32.mrf.mxu0
  %v1049 = vadd.f32 0.0, %v1048
  %1050 = vdwg.mxu0
  %1051 = vmatpush.msra.mxu0 0.0
  %1052 = vmatpush.msra.mxu0 0.0
  %1053 = vmatpush.msra.mxu0 0.0
  %1054 = vmatpush.msra.mxu0 0.0
  %1055 = vmatpush.msra.mxu0 0.0
  %1056 = vmatpush.msra.mxu0 0.0
  %1057 = vmatpush.msra.mxu0 0.0
  %1058 = vmatpush.msra.mxu0 0.0
  %1059 = vmatpush.msra.mxu0 0.0
  %1060 = vmatpush.msra.mxu0 0.0
  %1061 = vmatpush.msra.mxu0 0.0
  %1062 = vmatpush.msra.mxu0 0.0
  %1063 = vmatpush.msra.mxu0 %v1027
  %1064 = vmatpush.msra.mxu0 %v1026
  %1065 = vmatpush.msra.mxu0 %v1025
  %1066 = vmatpush.msra.mxu0 %v1024
  %1067 = vmatmul.f32.gmra.mxu0 %v1029
  %v1068 = vpop.f32.mrf.mxu0
  %v1069 = vadd.f32 %v1049, %v1068
  %1070 = vdwg.mxu0
  %v1071 = vadd.f32 %v1004, %v1069
  %v1072 = vld [vmem:[%s12] sm:$0x1]
  %v1074 = vperm.slane %v1072, 0
  %v1076 = vadd.f32 %v1071, %v1074
  %v1077 = vld [vmem:[%s14] sm:$0xff]
  %v1078 = vld [vmem:[%s14 + $0x8] sm:$0xff]
  %v1079 = vld [vmem:[%s14 + $0x10] sm:$0xff]
  %v1080 = vld [vmem:[%s14 + $0x18] sm:$0xff]
  %v1082 = vsel %vm723, %v1076, 0
  %1084 = vmatpush.msra.mxu0 0.0
  %1085 = vmatpush.msra.mxu0 0.0
  %1086 = vmatpush.msra.mxu0 0.0
  %1087 = vmatpush.msra.mxu0 0.0
  %1088 = vmatpush.msra.mxu0 0.0
  %1089 = vmatpush.msra.mxu0 0.0
  %1090 = vmatpush.msra.mxu0 0.0
  %1091 = vmatpush.msra.mxu0 0.0
  %1092 = vmatpush.msra.mxu0 0.0
  %1093 = vmatpush.msra.mxu0 0.0
  %1094 = vmatpush.msra.mxu0 0.0
  %1095 = vmatpush.msra.mxu0 0.0
  %1096 = vmatpush.msra.mxu0 %v1080
  %1097 = vmatpush.msra.mxu0 %v1079
  %1098 = vmatpush.msra.mxu0 %v1078
  %1099 = vmatpush.msra.mxu0 %v1077
  %1100 = vmatmul.f32.gmra.mxu0 %v1082
  %v1101 = vpop.f32.mrf.mxu0
  %v1102 = vadd.f32 0.0, %v1101
  %1103 = vdwg.mxu0
  %vm1104 = vcmask 523264
  %1105 = vst.msk [vmem:[#allocation4] sm:$0xff] %vm1104, 0.0
  %vm1106 = vcmask 517120
  %1107 = vst.msk [vmem:[#allocation4] sm:$0x3] %vm1106, %v1102
  %v1108 = vld [vmem:[%s4] sm:$0xff]
  %v1109 = vld [vmem:[%s4 + $0x8] sm:$0xff]
  %v1110 = vld [vmem:[#allocation4] sm:$0xff]
  %vm1111 = vcmask 64512
  %v1113 = vsel %vm1111, %v1108, 0
  %v1116 = vsel %vm1111, %v1109, 0
  %1118 = vmatpush.msra.mxu0 0.0
  %1119 = vmatpush.msra.mxu0 0.0
  %1120 = vmatpush.msra.mxu0 0.0
  %1121 = vmatpush.msra.mxu0 0.0
  %1122 = vmatpush.msra.mxu0 0.0
  %1123 = vmatpush.msra.mxu0 0.0
  %1124 = vmatpush.msra.mxu0 0.0
  %1125 = vmatpush.msra.mxu0 0.0
  %1126 = vmatpush.msra.mxu0 0.0
  %1127 = vmatpush.msra.mxu0 0.0
  %1128 = vmatpush.msra.mxu0 0.0
  %1129 = vmatpush.msra.mxu0 0.0
  %1130 = vmatpush.msra.mxu0 0.0
  %1131 = vmatpush.msra.mxu0 0.0
  %1132 = vmatpush.msra.mxu0 0.0
  %1133 = vmatpush.msra.mxu0 %v1110
  %1134 = vmatmul.f32.gmra.mxu0 %v1113
  %v1135 = vpop.f32.mrf.mxu0
  %v1136 = vadd.f32 0.0, %v1135
  %1137 = vmatmul.f32.gmra.mxu0 %v1116
  %v1138 = vpop.f32.mrf.mxu0
  %v1139 = vadd.f32 0.0, %v1138
  %1140 = vdwg.mxu0
  %v1141 = vld [vmem:[%s2] sm:$0xff]
  %v1142 = vld [vmem:[%s2 + $0x8] sm:$0xff]
  %v1143 = vld [vmem:[%s13] sm:$0xff]
  %v1145 = vsel %vm1111, %v1141, 0
  %v1148 = vsel %vm1111, %v1142, 0
  %1150 = vmatpush.msra.mxu0 0.0
  %1151 = vmatpush.msra.mxu0 0.0
  %1152 = vmatpush.msra.mxu0 0.0
  %1153 = vmatpush.msra.mxu0 0.0
  %1154 = vmatpush.msra.mxu0 0.0
  %1155 = vmatpush.msra.mxu0 0.0
  %1156 = vmatpush.msra.mxu0 0.0
  %1157 = vmatpush.msra.mxu0 0.0
  %1158 = vmatpush.msra.mxu0 0.0
  %1159 = vmatpush.msra.mxu0 0.0
  %1160 = vmatpush.msra.mxu0 0.0
  %1161 = vmatpush.msra.mxu0 0.0
  %1162 = vmatpush.msra.mxu0 0.0
  %1163 = vmatpush.msra.mxu0 0.0
  %1164 = vmatpush.msra.mxu0 0.0
  %1165 = vmatpush.msra.mxu0 %v1143
  %1166 = vmatmul.f32.gmra.mxu0 %v1145
  %v1167 = vpop.f32.mrf.mxu0
  %v1168 = vadd.f32 %v1136, %v1167
  %1169 = vmatmul.f32.gmra.mxu0 %v1148
  %v1170 = vpop.f32.mrf.mxu0
  %v1171 = vadd.f32 %v1139, %v1170
  %1172 = vdwg.mxu0
  %v1173 = vld [vmem:[%s15] sm:$0x1]
  %v1175 = vperm.slane %v1173, 0
  %v1177 = vadd.f32 %v1168, %v1175
  %v1178 = vadd.f32 %v1171, %v1175
  %v1179 = vmax.f32 %v1177, 0.0
  %v1180 = vmax.f32 %v1178, 0.0
  %v1181 = vld [vmem:[%s16] sm:$0xff]
  %v1182 = vld [vmem:[%s16 + $0x8] sm:$0xff]
  %v1183 = vld [vmem:[%s16 + $0x10] sm:$0xff]
  %v1184 = vld [vmem:[%s16 + $0x18] sm:$0xff]
  %v1185 = vld [vmem:[%s16 + $0x20] sm:$0xff]
  %v1186 = vld [vmem:[%s16 + $0x28] sm:$0xff]
  %v1187 = vld [vmem:[%s16 + $0x30] sm:$0xff]
  %v1188 = vld [vmem:[%s16 + $0x38] sm:$0xff]
  %v1189 = vld [vmem:[%s17] sm:$0x1]
  %v1191 = vperm.slane %v1189, 0
  %v1194 = vsel %vm1104, %v1179, 0
  %v1197 = vsel %vm1104, %v1180, 0
  %1199 = vmatpush.msra.mxu0 0.0
  %1200 = vmatpush.msra.mxu0 0.0
  %1201 = vmatpush.msra.mxu0 0.0
  %1202 = vmatpush.msra.mxu0 0.0
  %1203 = vmatpush.msra.mxu0 0.0
  %1204 = vmatpush.msra.mxu0 0.0
  %1205 = vmatpush.msra.mxu0 0.0
  %1206 = vmatpush.msra.mxu0 0.0
  %1207 = vmatpush.msra.mxu0 %v1188
  %1208 = vmatpush.msra.mxu0 %v1187
  %1209 = vmatpush.msra.mxu0 %v1186
  %1210 = vmatpush.msra.mxu0 %v1185
  %1211 = vmatpush.msra.mxu0 %v1184
  %1212 = vmatpush.msra.mxu0 %v1183
  %1213 = vmatpush.msra.mxu0 %v1182
  %1214 = vmatpush.msra.mxu0 %v1181
  %1215 = vmatmul.f32.gmra.mxu0 %v1194
  %v1216 = vpop.f32.mrf.mxu0
  %v1217 = vadd.f32 %v1191, %v1216
  %1218 = vmatmul.f32.gmra.mxu0 %v1197
  %v1219 = vpop.f32.mrf.mxu0
  %v1220 = vadd.f32 %v1191, %v1219
  %1221 = vdwg.mxu0
  %v1222 = vmax.f32 %v1217, 0.0
  %v1223 = vmax.f32 %v1220, 0.0
  %s1224 = scalar_lea.vmem %s16, 64
  %v1225 = vld [vmem:[%s1224] sm:$0xff]
  %v1226 = vld [vmem:[%s1224 + $0x8] sm:$0xff]
  %v1227 = vld [vmem:[%s1224 + $0x10] sm:$0xff]
  %v1228 = vld [vmem:[%s1224 + $0x18] sm:$0xff]
  %v1229 = vld [vmem:[%s1224 + $0x20] sm:$0xff]
  %v1230 = vld [vmem:[%s1224 + $0x28] sm:$0xff]
  %v1231 = vld [vmem:[%s1224 + $0x30] sm:$0xff]
  %v1232 = vld [vmem:[%s1224 + $0x38] sm:$0xff]
  %s1233 = scalar_lea.vmem %s17, 1
  %v1234 = vld [vmem:[%s1233] sm:$0x1]
  %v1236 = vperm.slane %v1234, 0
  %v1239 = vsel %vm1104, %v1222, 0
  %v1242 = vsel %vm1104, %v1223, 0
  %1244 = vmatpush.msra.mxu0 0.0
  %1245 = vmatpush.msra.mxu0 0.0
  %1246 = vmatpush.msra.mxu0 0.0
  %1247 = vmatpush.msra.mxu0 0.0
  %1248 = vmatpush.msra.mxu0 0.0
  %1249 = vmatpush.msra.mxu0 0.0
  %1250 = vmatpush.msra.mxu0 0.0
  %1251 = vmatpush.msra.mxu0 0.0
  %1252 = vmatpush.msra.mxu0 %v1232
  %1253 = vmatpush.msra.mxu0 %v1231
  %1254 = vmatpush.msra.mxu0 %v1230
  %1255 = vmatpush.msra.mxu0 %v1229
  %1256 = vmatpush.msra.mxu0 %v1228
  %1257 = vmatpush.msra.mxu0 %v1227
  %1258 = vmatpush.msra.mxu0 %v1226
  %1259 = vmatpush.msra.mxu0 %v1225
  %1260 = vmatmul.f32.gmra.mxu0 %v1239
  %v1261 = vpop.f32.mrf.mxu0
  %v1262 = vadd.f32 %v1236, %v1261
  %1263 = vmatmul.f32.gmra.mxu0 %v1242
  %v1264 = vpop.f32.mrf.mxu0
  %v1265 = vadd.f32 %v1236, %v1264
  %1266 = vdwg.mxu0
  %v1267 = vmax.f32 %v1262, 0.0
  %v1268 = vmax.f32 %v1265, 0.0
  %s1269 = scalar_lea.vmem %s16, 128
  %v1270 = vld [vmem:[%s1269] sm:$0xff]
  %v1271 = vld [vmem:[%s1269 + $0x8] sm:$0xff]
  %v1272 = vld [vmem:[%s1269 + $0x10] sm:$0xff]
  %v1273 = vld [vmem:[%s1269 + $0x18] sm:$0xff]
  %v1274 = vld [vmem:[%s1269 + $0x20] sm:$0xff]
  %v1275 = vld [vmem:[%s1269 + $0x28] sm:$0xff]
  %v1276 = vld [vmem:[%s1269 + $0x30] sm:$0xff]
  %v1277 = vld [vmem:[%s1269 + $0x38] sm:$0xff]
  %s1278 = scalar_lea.vmem %s17, 2
  %v1279 = vld [vmem:[%s1278] sm:$0x1]
  %v1281 = vperm.slane %v1279, 0
  %v1284 = vsel %vm1104, %v1267, 0
  %v1287 = vsel %vm1104, %v1268, 0
  %1289 = vmatpush.msra.mxu0 0.0
  %1290 = vmatpush.msra.mxu0 0.0
  %1291 = vmatpush.msra.mxu0 0.0
  %1292 = vmatpush.msra.mxu0 0.0
  %1293 = vmatpush.msra.mxu0 0.0
  %1294 = vmatpush.msra.mxu0 0.0
  %1295 = vmatpush.msra.mxu0 0.0
  %1296 = vmatpush.msra.mxu0 0.0
  %1297 = vmatpush.msra.mxu0 %v1277
  %1298 = vmatpush.msra.mxu0 %v1276
  %1299 = vmatpush.msra.mxu0 %v1275
  %1300 = vmatpush.msra.mxu0 %v1274
  %1301 = vmatpush.msra.mxu0 %v1273
  %1302 = vmatpush.msra.mxu0 %v1272
  %1303 = vmatpush.msra.mxu0 %v1271
  %1304 = vmatpush.msra.mxu0 %v1270
  %1305 = vmatmul.f32.gmra.mxu0 %v1284
  %v1306 = vpop.f32.mrf.mxu0
  %v1307 = vadd.f32 %v1281, %v1306
  %1308 = vmatmul.f32.gmra.mxu0 %v1287
  %v1309 = vpop.f32.mrf.mxu0
  %v1310 = vadd.f32 %v1281, %v1309
  %1311 = vdwg.mxu0
  %v1312 = vld [vmem:[%s6] sm:$0xff]
  %vm1313 = vcmask 130048
  %v1315 = vsel %vm1313, %v1312, 0
  %1317 = vmatpush.msra.mxu0 0.0
  %1318 = vmatpush.msra.mxu0 0.0
  %1319 = vmatpush.msra.mxu0 0.0
  %1320 = vmatpush.msra.mxu0 0.0
  %1321 = vmatpush.msra.mxu0 0.0
  %1322 = vmatpush.msra.mxu0 0.0
  %1323 = vmatpush.msra.mxu0 0.0
  %1324 = vmatpush.msra.mxu0 0.0
  %1325 = vmatpush.msra.mxu0 0.0
  %1326 = vmatpush.msra.mxu0 0.0
  %1327 = vmatpush.msra.mxu0 0.0
  %1328 = vmatpush.msra.mxu0 0.0
  %1329 = vmatpush.msra.mxu0 0.0
  %1330 = vmatpush.msra.mxu0 0.0
  %1331 = vmatpush.msra.mxu0 %v1310
  %1332 = vmatpush.msra.mxu0 %v1307
  %1333 = vmatmul.f32.gmra.mxu0 %v1315
  %v1334 = vpop.f32.mrf.mxu0
  %v1335 = vadd.f32 0.0, %v1334
  %1336 = vdwg.mxu0
  %v1337 = vld [vmem:[%s5] sm:$0xff]
  %v1338 = vld [vmem:[%s5 + $0x8] sm:$0xff]
  %v1340 = vsel %vm1111, %v1337, 0
  %v1343 = vsel %vm1111, %v1338, 0
  %1345 = vmatpush.msra.mxu0 0.0
  %1346 = vmatpush.msra.mxu0 0.0
  %1347 = vmatpush.msra.mxu0 0.0
  %1348 = vmatpush.msra.mxu0 0.0
  %1349 = vmatpush.msra.mxu0 0.0
  %1350 = vmatpush.msra.mxu0 0.0
  %1351 = vmatpush.msra.mxu0 0.0
  %1352 = vmatpush.msra.mxu0 0.0
  %1353 = vmatpush.msra.mxu0 0.0
  %1354 = vmatpush.msra.mxu0 0.0
  %1355 = vmatpush.msra.mxu0 0.0
  %1356 = vmatpush.msra.mxu0 0.0
  %1357 = vmatpush.msra.mxu0 0.0
  %1358 = vmatpush.msra.mxu0 0.0
  %1359 = vmatpush.msra.mxu0 0.0
  %1360 = vmatpush.msra.mxu0 %v1335
  %1361 = vmatmul.f32.gmra.mxu0 %v1340
  %v1362 = vpop.f32.mrf.mxu0
  %v1363 = vadd.f32 0.0, %v1362
  %1364 = vmatmul.f32.gmra.mxu0 %v1343
  %v1365 = vpop.f32.mrf.mxu0
  %v1366 = vadd.f32 0.0, %v1365
  %1367 = vdwg.mxu0
  %v1368 = vld [vmem:[%s3] sm:$0xff]
  %v1369 = vld [vmem:[%s3 + $0x8] sm:$0xff]
  %v1370 = vld [vmem:[%s19] sm:$0xff]
  %v1371 = vld [vmem:[%s18] sm:$0xff]
  %v1372 = vld [vmem:[%s18 + $0x8] sm:$0xff]
  %v1373 = vld [vmem:[%s18 + $0x10] sm:$0xff]
  %v1374 = vld [vmem:[%s18 + $0x18] sm:$0xff]
  %v1375 = vld [vmem:[%s18 + $0x20] sm:$0xff]
  %v1376 = vld [vmem:[%s18 + $0x28] sm:$0xff]
  %v1377 = vld [vmem:[%s18 + $0x30] sm:$0xff]
  %v1378 = vld [vmem:[%s18 + $0x38] sm:$0xff]
  %v1380 = vsel %vm1104, %v1363, 0
  %v1383 = vsel %vm1104, %v1366, 0
  %1385 = vmatpush.msra.mxu0 0.0
  %1386 = vmatpush.msra.mxu0 0.0
  %1387 = vmatpush.msra.mxu0 0.0
  %1388 = vmatpush.msra.mxu0 0.0
  %1389 = vmatpush.msra.mxu0 0.0
  %1390 = vmatpush.msra.mxu0 0.0
  %1391 = vmatpush.msra.mxu0 0.0
  %1392 = vmatpush.msra.mxu0 0.0
  %1393 = vmatpush.msra.mxu0 %v1378
  %1394 = vmatpush.msra.mxu0 %v1377
  %1395 = vmatpush.msra.mxu0 %v1376
  %1396 = vmatpush.msra.mxu0 %v1375
  %1397 = vmatpush.msra.mxu0 %v1374
  %1398 = vmatpush.msra.mxu0 %v1373
  %1399 = vmatpush.msra.mxu0 %v1372
  %1400 = vmatpush.msra.mxu0 %v1371
  %1401 = vmatmul.f32.gmra.mxu0 %v1380
  %v1402 = vpop.f32.mrf.mxu0
  %v1403 = vadd.f32 0.0, %v1402
  %1404 = vmatmul.f32.gmra.mxu0 %v1383
  %v1405 = vpop.f32.mrf.mxu0
  %v1406 = vadd.f32 0.0, %v1405
  %1407 = vdwg.mxu0
  %v1409 = vsel %vm1111, %v1368, 0
  %v1412 = vsel %vm1111, %v1369, 0
  %1414 = vmatpush.msra.mxu0 0.0
  %1415 = vmatpush.msra.mxu0 0.0
  %1416 = vmatpush.msra.mxu0 0.0
  %1417 = vmatpush.msra.mxu0 0.0
  %1418 = vmatpush.msra.mxu0 0.0
  %1419 = vmatpush.msra.mxu0 0.0
  %1420 = vmatpush.msra.mxu0 0.0
  %1421 = vmatpush.msra.mxu0 0.0
  %1422 = vmatpush.msra.mxu0 0.0
  %1423 = vmatpush.msra.mxu0 0.0
  %1424 = vmatpush.msra.mxu0 0.0
  %1425 = vmatpush.msra.mxu0 0.0
  %1426 = vmatpush.msra.mxu0 0.0
  %1427 = vmatpush.msra.mxu0 0.0
  %1428 = vmatpush.msra.mxu0 0.0
  %1429 = vmatpush.msra.mxu0 %v1370
  %1430 = vmatmul.f32.gmra.mxu0 %v1409
  %v1431 = vpop.f32.mrf.mxu0
  %v1432 = vadd.f32 %v1403, %v1431
  %1433 = vmatmul.f32.gmra.mxu0 %v1412
  %v1434 = vpop.f32.mrf.mxu0
  %v1435 = vadd.f32 %v1406, %v1434
  %1436 = vdwg.mxu0
  %v1437 = vld [vmem:[%s20] sm:$0x1]
  %v1439 = vperm.slane %v1437, 0
  %v1441 = vadd.f32 %v1432, %v1439
  %v1442 = vadd.f32 %v1435, %v1439
  %v1443 = vmax.f32 %v1441, 0.0
  %v1444 = vmax.f32 %v1442, 0.0
  %v1445 = vld [vmem:[%s21] sm:$0xff]
  %v1446 = vld [vmem:[%s21 + $0x8] sm:$0xff]
  %v1447 = vld [vmem:[%s21 + $0x10] sm:$0xff]
  %v1448 = vld [vmem:[%s21 + $0x18] sm:$0xff]
  %v1449 = vld [vmem:[%s21 + $0x20] sm:$0xff]
  %v1450 = vld [vmem:[%s21 + $0x28] sm:$0xff]
  %v1451 = vld [vmem:[%s21 + $0x30] sm:$0xff]
  %v1452 = vld [vmem:[%s21 + $0x38] sm:$0xff]
  %v1453 = vld [vmem:[%s22] sm:$0x1]
  %v1455 = vperm.slane %v1453, 0
  %v1458 = vsel %vm1104, %v1443, 0
  %v1461 = vsel %vm1104, %v1444, 0
  %1463 = vmatpush.msra.mxu0 0.0
  %1464 = vmatpush.msra.mxu0 0.0
  %1465 = vmatpush.msra.mxu0 0.0
  %1466 = vmatpush.msra.mxu0 0.0
  %1467 = vmatpush.msra.mxu0 0.0
  %1468 = vmatpush.msra.mxu0 0.0
  %1469 = vmatpush.msra.mxu0 0.0
  %1470 = vmatpush.msra.mxu0 0.0
  %1471 = vmatpush.msra.mxu0 %v1452
  %1472 = vmatpush.msra.mxu0 %v1451
  %1473 = vmatpush.msra.mxu0 %v1450
  %1474 = vmatpush.msra.mxu0 %v1449
  %1475 = vmatpush.msra.mxu0 %v1448
  %1476 = vmatpush.msra.mxu0 %v1447
  %1477 = vmatpush.msra.mxu0 %v1446
  %1478 = vmatpush.msra.mxu0 %v1445
  %1479 = vmatmul.f32.gmra.mxu0 %v1458
  %v1480 = vpop.f32.mrf.mxu0
  %v1481 = vadd.f32 %v1455, %v1480
  %1482 = vmatmul.f32.gmra.mxu0 %v1461
  %v1483 = vpop.f32.mrf.mxu0
  %v1484 = vadd.f32 %v1455, %v1483
  %1485 = vdwg.mxu0
  %v1486 = vmax.f32 %v1481, 0.0
  %v1487 = vmax.f32 %v1484, 0.0
  %v1488 = vld [vmem:[%s23] sm:$0xff]
  %v1489 = vld [vmem:[%s23 + $0x8] sm:$0xff]
  %v1490 = vld [vmem:[%s23 + $0x10] sm:$0xff]
  %v1491 = vld [vmem:[%s23 + $0x18] sm:$0xff]
  %v1492 = vld [vmem:[%s23 + $0x20] sm:$0xff]
  %v1493 = vld [vmem:[%s23 + $0x28] sm:$0xff]
  %v1494 = vld [vmem:[%s23 + $0x30] sm:$0xff]
  %v1495 = vld [vmem:[%s23 + $0x38] sm:$0xff]
  %v1496 = vld [vmem:[%s24] sm:$0x1]
  %v1498 = vperm.slane %v1496, 0
  %v1501 = vsel %vm1104, %v1486, 0
  %v1504 = vsel %vm1104, %v1487, 0
  %1506 = vmatpush.msra.mxu0 0.0
  %1507 = vmatpush.msra.mxu0 0.0
  %1508 = vmatpush.msra.mxu0 0.0
  %1509 = vmatpush.msra.mxu0 0.0
  %1510 = vmatpush.msra.mxu0 0.0
  %1511 = vmatpush.msra.mxu0 0.0
  %1512 = vmatpush.msra.mxu0 0.0
  %1513 = vmatpush.msra.mxu0 0.0
  %1514 = vmatpush.msra.mxu0 %v1495
  %1515 = vmatpush.msra.mxu0 %v1494
  %1516 = vmatpush.msra.mxu0 %v1493
  %1517 = vmatpush.msra.mxu0 %v1492
  %1518 = vmatpush.msra.mxu0 %v1491
  %1519 = vmatpush.msra.mxu0 %v1490
  %1520 = vmatpush.msra.mxu0 %v1489
  %1521 = vmatpush.msra.mxu0 %v1488
  %1522 = vmatmul.f32.gmra.mxu0 %v1501
  %v1523 = vpop.f32.mrf.mxu0
  %v1524 = vadd.f32 %v1498, %v1523
  %1525 = vmatmul.f32.gmra.mxu0 %v1504
  %v1526 = vpop.f32.mrf.mxu0
  %v1527 = vadd.f32 %v1498, %v1526
  %1528 = vdwg.mxu0
  %vm1529 = vcmask 15360
  %1530 = vst.msk [vmem:[%s25] sm:$0xff] %vm1529, %v1524
  %1531 = vst.msk [vmem:[%s25 + $0x8] sm:$0xff] %vm1529, %v1527
  // Predicated region
  $region102: #{conv_cnmp_forward.1} parent=0 // pred_check
    _
  $region103: #{conv_cnmp_forward.1} parent=0 // pred_check_branch
    %1533 = sbr.rel (0) target = $region105
  $region104: #{conv_cnmp_forward.1} parent=0 // pred_region
    _
  $region105: #{conv_cnmp_forward.1} parent=0 // pred_fallthru
    _
  // Predicated region
  $region106: #{conv_cnmp_forward.1} parent=0 // pred_check
    _
  $region107: #{conv_cnmp_forward.1} parent=0 // pred_check_branch
    %1535 = sbr.rel (0) target = $region109
  $region108: #{conv_cnmp_forward.1} parent=0 // pred_region
    _
  $region109: #{conv_cnmp_forward.1} parent=0 // pred_fallthru
    _

</llo_original>
